<compile_context>
chip_gen: v7x
topology: tpu7x:2x2x1
jax: 0.10.0
libtpu: 0.0.40
codegen_flags: <defaults>
</compile_context>

<pallas_src>
import jax
import jax.numpy as jnp
from jax.experimental import pallas as pl
from jax.experimental.pallas import tpu as pltpu

EMB = 32                     # synthetic embedder hidden size
HID = 64                     # ops_kwargs['hidden_size']
NUM_LAYERS = 2               # ops_kwargs['num_layers']
OUTPUT_SIZES = 20
OPS = ('add', 'sub', 'abs_diff', 'mul', 'div', 'max', 'argmax')
MODEL_TYPE = 'classifier'

NUM_OPS = len(OPS)                   # 7 real heads
NUM_HEAD_SLOTS = 8                   # layer-1 padded to 8 slots -> 512 lanes (4 vregs)
WIDE = NUM_HEAD_SLOTS * HID          # 512
OUT_PAD = 256                        # per-head output cols padded 191/1 -> 256 (2 vregs)


def _head_out_dim(op):
    if MODEL_TYPE == 'regressor' or op == 'argmax':
        return 1
    elif MODEL_TYPE == 'classifier':
        return (OUTPUT_SIZES - 1) * 10 + 1          # 191
    else:
        return OUTPUT_SIZES


# ----------------------------- Pallas kernel --------------------------------

def fused_forward_kernel(x0_ref, x1_ref, we_ref, be_ref,
                         w1a_ref, w1b_ref, b1_ref,
                         w2c_ref, b2c_ref,
                         w3c_ref, b3c_ref,
                         o_ref):
    """Embed both scalars + all op heads for one batch tile.

    x0/x1: (T, 1) f32         pre-split scalars
    w1a/w1b: (EMB, WIDE) bf16 layer-1 weights, split-K (avoids feats concat)
    w2c: (7, HID, HID) bf16   compact per-head layer-2 stack
    w3c: (7, HID, OUT_PAD) bf16 compact per-head output stack (cols zero-padded)
    o:   (T, 7, OUT_PAD) f32  lane-dense slab; sliced per op in the wrapper
    """
    we = we_ref[...]                                  # (1, EMB) f32
    be = be_ref[...]                                  # (1, EMB) f32

    # Synthetic scalar embedder (tanh runs on the EUP slot -> effectively free).
    e0 = jnp.tanh(x0_ref[...] * we + be).astype(jnp.bfloat16)   # (T, EMB)
    e1 = jnp.tanh(x1_ref[...] * we + be).astype(jnp.bfloat16)   # (T, EMB)

    # Layer 1, all heads fused into one wide matmul, split-K (no feats concat).
    h = (jnp.dot(e0, w1a_ref[...], preferred_element_type=jnp.float32)
         + jnp.dot(e1, w1b_ref[...], preferred_element_type=jnp.float32)
         + b1_ref[...])                               # (T, WIDE) f32
    h = jnp.maximum(h, 0.0)                           # ReLU (dropout = identity)

    # Layers 2 + 3: compact per-head stacks, unrolled static head loop.
    for hd in range(NUM_OPS):
        hb = h[:, hd * HID:(hd + 1) * HID].astype(jnp.bfloat16)        # (T, HID)
        z = (jnp.dot(hb, w2c_ref[hd], preferred_element_type=jnp.float32)
             + b2c_ref[hd:hd + 1, :])                                  # (T, HID)
        z = jnp.maximum(z, 0.0).astype(jnp.bfloat16)
        o_ref[:, hd, :] = (jnp.dot(z, w3c_ref[hd],
                                   preferred_element_type=jnp.float32)
                           + b3c_ref[hd:hd + 1, :]).astype(o_ref.dtype)


# ------------------------------- wrapper -------------------------------------

def arithmetic_operator_forward(x, packed, *, batch_tile=256):
    """Mirrors ArithmeticOperator.forward: returns a dict {op: [B, out_dim]}."""
    x = jnp.asarray(x, jnp.float32)
    B = x.shape[0]
    x0 = x[:, 0:1]
    x1 = x[:, 1:2]

    # Batch tiling: single step at small B; grid over batch at large B so the
    # resident weights amortize and v7x's two TensorCores split the work.
    tile = B if B <= batch_tile else batch_tile
    Bp = ((B + tile - 1) // tile) * tile
    if Bp != B:
        x0 = jnp.pad(x0, ((0, Bp - B), (0, 0)))
        x1 = jnp.pad(x1, ((0, Bp - B), (0, 0)))

    row_map = lambda i: (i, 0)
    const2 = lambda i: (0, 0)          # weights: same block every step -> stay resident
    const3 = lambda i: (0, 0, 0)

    slab = pl.pallas_call(
        fused_forward_kernel,
        out_shape=jax.ShapeDtypeStruct((Bp, NUM_OPS, OUT_PAD), jnp.float32),
        grid_spec=pltpu.PrefetchScalarGridSpec(
            num_scalar_prefetch=0,
            grid=(Bp // tile,),
            in_specs=[
                pl.BlockSpec((tile, 1), row_map),              # x0
                pl.BlockSpec((tile, 1), row_map),              # x1
                pl.BlockSpec((1, EMB), const2),                # emb_w
                pl.BlockSpec((1, EMB), const2),                # emb_b
                pl.BlockSpec((EMB, WIDE), const2),             # w1a (bf16)
                pl.BlockSpec((EMB, WIDE), const2),             # w1b (bf16)
                pl.BlockSpec((1, WIDE), const2),               # b1
                pl.BlockSpec((NUM_OPS, HID, HID), const3),     # w2c (bf16)
                pl.BlockSpec((NUM_OPS, HID), const2),          # b2c
                pl.BlockSpec((NUM_OPS, HID, OUT_PAD), const3), # w3c (bf16)
                pl.BlockSpec((NUM_OPS, OUT_PAD), const2),      # b3c
            ],
            out_specs=pl.BlockSpec((tile, NUM_OPS, OUT_PAD), lambda i: (i, 0, 0)),
        ),
        compiler_params=pltpu.CompilerParams(
            dimension_semantics=("parallel",)),
    )(x0, x1, packed['emb_w'], packed['emb_b'],
      packed['w1a'], packed['w1b'], packed['b1'],
      packed['w2c'], packed['b2c'], packed['w3c'], packed['b3c'])

    # Un-pad: slice each head's logits out of the lane-dense slab.
    out = {}
    for hd, op in enumerate(OPS):
        d = _head_out_dim(op)
        out[op] = slab[:B, hd, :d]
    return out


# --------------------------- parameter creation ------------------------------

def init_params(key):
    """Per-op parameters, identical layout/distribution to the original module."""
    def dense(k, fan_in, fan_out):
        kw, kb = jax.random.split(k)
        scale = 1.0 / jnp.sqrt(jnp.float32(fan_in))
        w = jax.random.uniform(kw, (fan_in, fan_out), jnp.float32, -scale, scale)
        b = jax.random.uniform(kb, (1, fan_out), jnp.float32, -scale, scale)
        return w, b

    k_emb, k_heads = jax.random.split(key)
    emb_w, emb_b = dense(k_emb, 1, EMB)                 # synthetic scalar embedder

    heads = {}
    head_keys = jax.random.split(k_heads, len(OPS))
    in_size = 2 * EMB
    for op, hk in zip(OPS, head_keys):
        k1, k2, k3 = jax.random.split(hk, 3)
        w1, b1 = dense(k1, in_size, HID)                # hidden layer 1
        w2, b2 = dense(k2, HID, HID)                    # hidden layer 2
        w3, b3 = dense(k3, HID, _head_out_dim(op))      # task output layer
        heads[op] = (w1, b1, w2, b2, w3, b3)

    return {'emb_w': emb_w, 'emb_b': emb_b, 'heads': heads}


def pack_params(params):
    """One-time packing: wide layer-1 + compact bf16 per-head stacks."""
    w1p = jnp.zeros((2 * EMB, WIDE), jnp.float32)
    b1p = jnp.zeros((1, WIDE), jnp.float32)
    w2c = jnp.zeros((NUM_OPS, HID, HID), jnp.float32)
    b2c = jnp.zeros((NUM_OPS, HID), jnp.float32)
    w3c = jnp.zeros((NUM_OPS, HID, OUT_PAD), jnp.float32)
    b3c = jnp.zeros((NUM_OPS, OUT_PAD), jnp.float32)

    for hd, op in enumerate(OPS):
        w1, b1, w2, b2, w3, b3 = params['heads'][op]
        c0, c1 = hd * HID, (hd + 1) * HID
        w1p = w1p.at[:, c0:c1].set(w1)
        b1p = b1p.at[:, c0:c1].set(b1)
        w2c = w2c.at[hd].set(w2)
        b2c = b2c.at[hd].set(b2[0])
        d = w3.shape[1]
        w3c = w3c.at[hd, :, :d].set(w3)                 # column-padded to OUT_PAD
        b3c = b3c.at[hd, :d].set(b3[0])

    # bf16 weights (MXU-native, halves DMA); biases stay f32.
    # TODO(synk): on v7x any further quantization must be fp8 (no int8 MXU path).
    return {
        'emb_w': params['emb_w'], 'emb_b': params['emb_b'],
        'w1a': w1p[:EMB, :].astype(jnp.bfloat16),       # split-K layer 1
        'w1b': w1p[EMB:, :].astype(jnp.bfloat16),
        'b1': b1p,
        'w2c': w2c.astype(jnp.bfloat16), 'b2c': b2c,
        'w3c': w3c.astype(jnp.bfloat16), 'b3c': b3c,
    }


# ------------------------- pure-JAX reference (check) ------------------------

def reference_forward(x, params):
    e0 = jnp.tanh(x[:, 0:1] * params['emb_w'] + params['emb_b'])
    e1 = jnp.tanh(x[:, 1:2] * params['emb_w'] + params['emb_b'])
    feats = jnp.concatenate([e0, e1], axis=-1)
    out = {}
    for op in OPS:
        w1, b1, w2, b2, w3, b3 = params['heads'][op]
        h = jnp.maximum(feats @ w1 + b1, 0.0)
        h = jnp.maximum(h @ w2 + b2, 0.0)
        out[op] = h @ w3 + b3
    return out


# ----------------------------------- main ------------------------------------

if __name__ == "__main__":
    key = jax.random.PRNGKey(0)
    k_params, k_x = jax.random.split(key)

    params = init_params(k_params)
    packed = pack_params(params)                       # done once, outside forward

    batch = 8
    x = jax.random.normal(k_x, (batch, 2), dtype=jnp.float32)  # two numbers / row

    out = arithmetic_operator_forward(x, packed)
    out = jax.tree_util.tree_map(jax.block_until_ready, out)

    # sanity: shapes match PyTorch semantics and values match an unfused f32
    # reference (tolerance accepts bf16-weight / bf16-MXU class error).
    ref = reference_forward(x, params)
    for op in OPS:
        expect = (batch, _head_out_dim(op))
        assert out[op].shape == expect, (op, out[op].shape, expect)
        assert jnp.allclose(out[op], ref[op], atol=3e-2, rtol=3e-2), op

    print("KERNEL_OK")
</pallas_src>

<mosaic_0001>
module attributes {stable_mosaic.version = 11 : i64} {
  func.func @fused_forward_kernel(%arg0: i32, %arg1: memref<8x1xf32, #tpu.memory_space<vmem>>, %arg2: memref<8x1xf32, #tpu.memory_space<vmem>>, %arg3: memref<1x32xf32, #tpu.memory_space<vmem>>, %arg4: memref<1x32xf32, #tpu.memory_space<vmem>>, %arg5: memref<32x512xbf16, #tpu.memory_space<vmem>>, %arg6: memref<32x512xbf16, #tpu.memory_space<vmem>>, %arg7: memref<1x512xf32, #tpu.memory_space<vmem>>, %arg8: memref<7x64x64xbf16, #tpu.memory_space<vmem>>, %arg9: memref<7x64xf32, #tpu.memory_space<vmem>>, %arg10: memref<7x64x256xbf16, #tpu.memory_space<vmem>>, %arg11: memref<7x256xf32, #tpu.memory_space<vmem>>, %arg12: memref<8x7x256xf32, #tpu.memory_space<vmem>>) attributes {dimension_semantics = [#tpu.dimension_semantics<parallel>], iteration_bounds = array<i64: 1>, scalar_prefetch = 0 : i64, scratch_operands = 0 : i64, tpu.core_type = #tpu.core_type<tc>, window_params = [{transform_indices = @transform_0, window_bounds = array<i64: 8, 1>}, {transform_indices = @transform_1, window_bounds = array<i64: 8, 1>}, {pipeline_mode = #tpu.pipeline_mode<synchronous>, transform_indices = @transform_2, window_bounds = array<i64: 1, 32>}, {pipeline_mode = #tpu.pipeline_mode<synchronous>, transform_indices = @transform_3, window_bounds = array<i64: 1, 32>}, {pipeline_mode = #tpu.pipeline_mode<synchronous>, transform_indices = @transform_4, window_bounds = array<i64: 32, 512>}, {pipeline_mode = #tpu.pipeline_mode<synchronous>, transform_indices = @transform_5, window_bounds = array<i64: 32, 512>}, {pipeline_mode = #tpu.pipeline_mode<synchronous>, transform_indices = @transform_6, window_bounds = array<i64: 1, 512>}, {pipeline_mode = #tpu.pipeline_mode<synchronous>, transform_indices = @transform_7, window_bounds = array<i64: 7, 64, 64>}, {pipeline_mode = #tpu.pipeline_mode<synchronous>, transform_indices = @transform_8, window_bounds = array<i64: 7, 64>}, {pipeline_mode = #tpu.pipeline_mode<synchronous>, transform_indices = @transform_9, window_bounds = array<i64: 7, 64, 256>}, {pipeline_mode = #tpu.pipeline_mode<synchronous>, transform_indices = @transform_10, window_bounds = array<i64: 7, 256>}, {transform_indices = @transform_11, window_bounds = array<i64: 8, 7, 256>}]} {
    %c0 = arith.constant 0 : index
    %c0_0 = arith.constant 0 : index
    %0 = vector.load %arg3[%c0, %c0_0] : memref<1x32xf32, #tpu.memory_space<vmem>>, vector<1x32xf32>
    %c0_1 = arith.constant 0 : index
    %c0_2 = arith.constant 0 : index
    %1 = vector.load %arg4[%c0_1, %c0_2] : memref<1x32xf32, #tpu.memory_space<vmem>>, vector<1x32xf32>
    %c0_3 = arith.constant 0 : index
    %c0_4 = arith.constant 0 : index
    %2 = vector.load %arg1[%c0_3, %c0_4] : memref<8x1xf32, #tpu.memory_space<vmem>>, vector<8x1xf32>
    %3 = vector.broadcast %2 : vector<8x1xf32> to vector<8x32xf32>
    %4 = vector.broadcast %0 : vector<1x32xf32> to vector<8x32xf32>
    %5 = arith.mulf %3, %4 : vector<8x32xf32>
    %6 = vector.broadcast %1 : vector<1x32xf32> to vector<8x32xf32>
    %7 = arith.addf %5, %6 : vector<8x32xf32>
    %8 = math.tanh %7 : vector<8x32xf32>
    %9 = arith.truncf %8 : vector<8x32xf32> to vector<8x32xbf16>
    %c0_5 = arith.constant 0 : index
    %c0_6 = arith.constant 0 : index
    %10 = vector.load %arg2[%c0_5, %c0_6] : memref<8x1xf32, #tpu.memory_space<vmem>>, vector<8x1xf32>
    %11 = vector.broadcast %10 : vector<8x1xf32> to vector<8x32xf32>
    %12 = vector.broadcast %0 : vector<1x32xf32> to vector<8x32xf32>
    %13 = arith.mulf %11, %12 : vector<8x32xf32>
    %14 = vector.broadcast %1 : vector<1x32xf32> to vector<8x32xf32>
    %15 = arith.addf %13, %14 : vector<8x32xf32>
    %16 = math.tanh %15 : vector<8x32xf32>
    %17 = arith.truncf %16 : vector<8x32xf32> to vector<8x32xbf16>
    %c0_7 = arith.constant 0 : index
    %c0_8 = arith.constant 0 : index
    %18 = vector.load %arg5[%c0_7, %c0_8] : memref<32x512xbf16, #tpu.memory_space<vmem>>, vector<32x512xbf16>
    %cst = arith.constant dense<0.000000e+00> : vector<8x512xf32>
    %19 = tpu.matmul %9, %18, %cst {dimension_numbers = #tpu.dot_dimension_numbers<[1], [0], [0], [1], [0, 0, 1, 1], [], []>} : vector<8x32xbf16>, vector<32x512xbf16>, vector<8x512xf32> -> vector<8x512xf32>
    %c0_9 = arith.constant 0 : index
    %c0_10 = arith.constant 0 : index
    %20 = vector.load %arg6[%c0_9, %c0_10] : memref<32x512xbf16, #tpu.memory_space<vmem>>, vector<32x512xbf16>
    %cst_11 = arith.constant dense<0.000000e+00> : vector<8x512xf32>
    %21 = tpu.matmul %17, %20, %cst_11 {dimension_numbers = #tpu.dot_dimension_numbers<[1], [0], [0], [1], [0, 0, 1, 1], [], []>} : vector<8x32xbf16>, vector<32x512xbf16>, vector<8x512xf32> -> vector<8x512xf32>
    %22 = arith.addf %19, %21 : vector<8x512xf32>
    %c0_12 = arith.constant 0 : index
    %c0_13 = arith.constant 0 : index
    %23 = vector.load %arg7[%c0_12, %c0_13] : memref<1x512xf32, #tpu.memory_space<vmem>>, vector<1x512xf32>
    %24 = vector.broadcast %23 : vector<1x512xf32> to vector<8x512xf32>
    %25 = arith.addf %22, %24 : vector<8x512xf32>
    %cst_14 = arith.constant 0.000000e+00 : f32
    %26 = vector.broadcast %cst_14 : f32 to vector<8x512xf32>
    %27 = arith.maximumf %25, %26 : vector<8x512xf32>
    %28 = vector.extract_strided_slice %27 {offsets = [0, 0], sizes = [8, 64], strides = [1, 1]} : vector<8x512xf32> to vector<8x64xf32>
    %29 = arith.truncf %28 : vector<8x64xf32> to vector<8x64xbf16>
    %c0_15 = arith.constant 0 : index
    %c0_16 = arith.constant 0 : index
    %c0_17 = arith.constant 0 : index
    %30 = vector.load %arg8[%c0_15, %c0_16, %c0_17] : memref<7x64x64xbf16, #tpu.memory_space<vmem>>, vector<1x64x64xbf16>
    %31 = vector.shape_cast %30 : vector<1x64x64xbf16> to vector<64x64xbf16>
    %cst_18 = arith.constant dense<0.000000e+00> : vector<8x64xf32>
    %32 = tpu.matmul %29, %31, %cst_18 {dimension_numbers = #tpu.dot_dimension_numbers<[1], [0], [0], [1], [0, 0, 1, 1], [], []>} : vector<8x64xbf16>, vector<64x64xbf16>, vector<8x64xf32> -> vector<8x64xf32>
    %c0_19 = arith.constant 0 : index
    %c0_20 = arith.constant 0 : index
    %33 = vector.load %arg9[%c0_19, %c0_20] : memref<7x64xf32, #tpu.memory_space<vmem>>, vector<1x64xf32>
    %34 = vector.broadcast %33 : vector<1x64xf32> to vector<8x64xf32>
    %35 = arith.addf %32, %34 : vector<8x64xf32>
    %cst_21 = arith.constant 0.000000e+00 : f32
    %36 = vector.broadcast %cst_21 : f32 to vector<8x64xf32>
    %37 = arith.maximumf %35, %36 : vector<8x64xf32>
    %38 = arith.truncf %37 : vector<8x64xf32> to vector<8x64xbf16>
    %c0_22 = arith.constant 0 : index
    %c0_23 = arith.constant 0 : index
    %c0_24 = arith.constant 0 : index
    %39 = vector.load %arg10[%c0_22, %c0_23, %c0_24] : memref<7x64x256xbf16, #tpu.memory_space<vmem>>, vector<1x64x256xbf16>
    %40 = vector.shape_cast %39 : vector<1x64x256xbf16> to vector<64x256xbf16>
    %cst_25 = arith.constant dense<0.000000e+00> : vector<8x256xf32>
    %41 = tpu.matmul %38, %40, %cst_25 {dimension_numbers = #tpu.dot_dimension_numbers<[1], [0], [0], [1], [0, 0, 1, 1], [], []>} : vector<8x64xbf16>, vector<64x256xbf16>, vector<8x256xf32> -> vector<8x256xf32>
    %c0_26 = arith.constant 0 : index
    %c0_27 = arith.constant 0 : index
    %42 = vector.load %arg11[%c0_26, %c0_27] : memref<7x256xf32, #tpu.memory_space<vmem>>, vector<1x256xf32>
    %43 = vector.broadcast %42 : vector<1x256xf32> to vector<8x256xf32>
    %44 = arith.addf %41, %43 : vector<8x256xf32>
    %c0_28 = arith.constant 0 : index
    %c0_29 = arith.constant 0 : index
    %c0_30 = arith.constant 0 : index
    %45 = vector.load %arg12[%c0_28, %c0_29, %c0_30] : memref<8x7x256xf32, #tpu.memory_space<vmem>>, vector<8x1x256xf32>
    %46 = vector.shape_cast %45 : vector<8x1x256xf32> to vector<8x256xf32>
    %47 = vector.shape_cast %44 : vector<8x256xf32> to vector<8x1x256xf32>
    tpu.vector_store %arg12[%c0_28, %c0_29, %c0_30], %47 {strides = array<i32>} : memref<8x7x256xf32, #tpu.memory_space<vmem>>, vector<8x1x256xf32>,
    %48 = vector.extract_strided_slice %27 {offsets = [0, 64], sizes = [8, 64], strides = [1, 1]} : vector<8x512xf32> to vector<8x64xf32>
    %49 = arith.truncf %48 : vector<8x64xf32> to vector<8x64xbf16>
    %c1 = arith.constant 1 : index
    %c0_31 = arith.constant 0 : index
    %c0_32 = arith.constant 0 : index
    %50 = vector.load %arg8[%c1, %c0_31, %c0_32] : memref<7x64x64xbf16, #tpu.memory_space<vmem>>, vector<1x64x64xbf16>
    %51 = vector.shape_cast %50 : vector<1x64x64xbf16> to vector<64x64xbf16>
    %cst_33 = arith.constant dense<0.000000e+00> : vector<8x64xf32>
    %52 = tpu.matmul %49, %51, %cst_33 {dimension_numbers = #tpu.dot_dimension_numbers<[1], [0], [0], [1], [0, 0, 1, 1], [], []>} : vector<8x64xbf16>, vector<64x64xbf16>, vector<8x64xf32> -> vector<8x64xf32>
    %c1_34 = arith.constant 1 : index
    %c0_35 = arith.constant 0 : index
    %53 = vector.load %arg9[%c1_34, %c0_35] : memref<7x64xf32, #tpu.memory_space<vmem>>, vector<1x64xf32>
    %54 = vector.broadcast %53 : vector<1x64xf32> to vector<8x64xf32>
    %55 = arith.addf %52, %54 : vector<8x64xf32>
    %cst_36 = arith.constant 0.000000e+00 : f32
    %56 = vector.broadcast %cst_36 : f32 to vector<8x64xf32>
    %57 = arith.maximumf %55, %56 : vector<8x64xf32>
    %58 = arith.truncf %57 : vector<8x64xf32> to vector<8x64xbf16>
    %c1_37 = arith.constant 1 : index
    %c0_38 = arith.constant 0 : index
    %c0_39 = arith.constant 0 : index
    %59 = vector.load %arg10[%c1_37, %c0_38, %c0_39] : memref<7x64x256xbf16, #tpu.memory_space<vmem>>, vector<1x64x256xbf16>
    %60 = vector.shape_cast %59 : vector<1x64x256xbf16> to vector<64x256xbf16>
    %cst_40 = arith.constant dense<0.000000e+00> : vector<8x256xf32>
    %61 = tpu.matmul %58, %60, %cst_40 {dimension_numbers = #tpu.dot_dimension_numbers<[1], [0], [0], [1], [0, 0, 1, 1], [], []>} : vector<8x64xbf16>, vector<64x256xbf16>, vector<8x256xf32> -> vector<8x256xf32>
    %c1_41 = arith.constant 1 : index
    %c0_42 = arith.constant 0 : index
    %62 = vector.load %arg11[%c1_41, %c0_42] : memref<7x256xf32, #tpu.memory_space<vmem>>, vector<1x256xf32>
    %63 = vector.broadcast %62 : vector<1x256xf32> to vector<8x256xf32>
    %64 = arith.addf %61, %63 : vector<8x256xf32>
    %c0_43 = arith.constant 0 : index
    %c1_44 = arith.constant 1 : index
    %c0_45 = arith.constant 0 : index
    %65 = vector.load %arg12[%c0_43, %c1_44, %c0_45] : memref<8x7x256xf32, #tpu.memory_space<vmem>>, vector<8x1x256xf32>
    %66 = vector.shape_cast %65 : vector<8x1x256xf32> to vector<8x256xf32>
    %67 = vector.shape_cast %64 : vector<8x256xf32> to vector<8x1x256xf32>
    tpu.vector_store %arg12[%c0_43, %c1_44, %c0_45], %67 {strides = array<i32>} : memref<8x7x256xf32, #tpu.memory_space<vmem>>, vector<8x1x256xf32>,
    %68 = vector.extract_strided_slice %27 {offsets = [0, 128], sizes = [8, 64], strides = [1, 1]} : vector<8x512xf32> to vector<8x64xf32>
    %69 = arith.truncf %68 : vector<8x64xf32> to vector<8x64xbf16>
    %c2 = arith.constant 2 : index
    %c0_46 = arith.constant 0 : index
    %c0_47 = arith.constant 0 : index
    %70 = vector.load %arg8[%c2, %c0_46, %c0_47] : memref<7x64x64xbf16, #tpu.memory_space<vmem>>, vector<1x64x64xbf16>
    %71 = vector.shape_cast %70 : vector<1x64x64xbf16> to vector<64x64xbf16>
    %cst_48 = arith.constant dense<0.000000e+00> : vector<8x64xf32>
    %72 = tpu.matmul %69, %71, %cst_48 {dimension_numbers = #tpu.dot_dimension_numbers<[1], [0], [0], [1], [0, 0, 1, 1], [], []>} : vector<8x64xbf16>, vector<64x64xbf16>, vector<8x64xf32> -> vector<8x64xf32>
    %c2_49 = arith.constant 2 : index
    %c0_50 = arith.constant 0 : index
    %73 = vector.load %arg9[%c2_49, %c0_50] : memref<7x64xf32, #tpu.memory_space<vmem>>, vector<1x64xf32>
    %74 = vector.broadcast %73 : vector<1x64xf32> to vector<8x64xf32>
    %75 = arith.addf %72, %74 : vector<8x64xf32>
    %cst_51 = arith.constant 0.000000e+00 : f32
    %76 = vector.broadcast %cst_51 : f32 to vector<8x64xf32>
    %77 = arith.maximumf %75, %76 : vector<8x64xf32>
    %78 = arith.truncf %77 : vector<8x64xf32> to vector<8x64xbf16>
    %c2_52 = arith.constant 2 : index
    %c0_53 = arith.constant 0 : index
    %c0_54 = arith.constant 0 : index
    %79 = vector.load %arg10[%c2_52, %c0_53, %c0_54] : memref<7x64x256xbf16, #tpu.memory_space<vmem>>, vector<1x64x256xbf16>
    %80 = vector.shape_cast %79 : vector<1x64x256xbf16> to vector<64x256xbf16>
    %cst_55 = arith.constant dense<0.000000e+00> : vector<8x256xf32>
    %81 = tpu.matmul %78, %80, %cst_55 {dimension_numbers = #tpu.dot_dimension_numbers<[1], [0], [0], [1], [0, 0, 1, 1], [], []>} : vector<8x64xbf16>, vector<64x256xbf16>, vector<8x256xf32> -> vector<8x256xf32>
    %c2_56 = arith.constant 2 : index
    %c0_57 = arith.constant 0 : index
    %82 = vector.load %arg11[%c2_56, %c0_57] : memref<7x256xf32, #tpu.memory_space<vmem>>, vector<1x256xf32>
    %83 = vector.broadcast %82 : vector<1x256xf32> to vector<8x256xf32>
    %84 = arith.addf %81, %83 : vector<8x256xf32>
    %c0_58 = arith.constant 0 : index
    %c2_59 = arith.constant 2 : index
    %c0_60 = arith.constant 0 : index
    %85 = vector.load %arg12[%c0_58, %c2_59, %c0_60] : memref<8x7x256xf32, #tpu.memory_space<vmem>>, vector<8x1x256xf32>
    %86 = vector.shape_cast %85 : vector<8x1x256xf32> to vector<8x256xf32>
    %87 = vector.shape_cast %84 : vector<8x256xf32> to vector<8x1x256xf32>
    tpu.vector_store %arg12[%c0_58, %c2_59, %c0_60], %87 {strides = array<i32>} : memref<8x7x256xf32, #tpu.memory_space<vmem>>, vector<8x1x256xf32>,
    %88 = vector.extract_strided_slice %27 {offsets = [0, 192], sizes = [8, 64], strides = [1, 1]} : vector<8x512xf32> to vector<8x64xf32>
    %89 = arith.truncf %88 : vector<8x64xf32> to vector<8x64xbf16>
    %c3 = arith.constant 3 : index
    %c0_61 = arith.constant 0 : index
    %c0_62 = arith.constant 0 : index
    %90 = vector.load %arg8[%c3, %c0_61, %c0_62] : memref<7x64x64xbf16, #tpu.memory_space<vmem>>, vector<1x64x64xbf16>
    %91 = vector.shape_cast %90 : vector<1x64x64xbf16> to vector<64x64xbf16>
    %cst_63 = arith.constant dense<0.000000e+00> : vector<8x64xf32>
    %92 = tpu.matmul %89, %91, %cst_63 {dimension_numbers = #tpu.dot_dimension_numbers<[1], [0], [0], [1], [0, 0, 1, 1], [], []>} : vector<8x64xbf16>, vector<64x64xbf16>, vector<8x64xf32> -> vector<8x64xf32>
    %c3_64 = arith.constant 3 : index
    %c0_65 = arith.constant 0 : index
    %93 = vector.load %arg9[%c3_64, %c0_65] : memref<7x64xf32, #tpu.memory_space<vmem>>, vector<1x64xf32>
    %94 = vector.broadcast %93 : vector<1x64xf32> to vector<8x64xf32>
    %95 = arith.addf %92, %94 : vector<8x64xf32>
    %cst_66 = arith.constant 0.000000e+00 : f32
    %96 = vector.broadcast %cst_66 : f32 to vector<8x64xf32>
    %97 = arith.maximumf %95, %96 : vector<8x64xf32>
    %98 = arith.truncf %97 : vector<8x64xf32> to vector<8x64xbf16>
    %c3_67 = arith.constant 3 : index
    %c0_68 = arith.constant 0 : index
    %c0_69 = arith.constant 0 : index
    %99 = vector.load %arg10[%c3_67, %c0_68, %c0_69] : memref<7x64x256xbf16, #tpu.memory_space<vmem>>, vector<1x64x256xbf16>
    %100 = vector.shape_cast %99 : vector<1x64x256xbf16> to vector<64x256xbf16>
    %cst_70 = arith.constant dense<0.000000e+00> : vector<8x256xf32>
    %101 = tpu.matmul %98, %100, %cst_70 {dimension_numbers = #tpu.dot_dimension_numbers<[1], [0], [0], [1], [0, 0, 1, 1], [], []>} : vector<8x64xbf16>, vector<64x256xbf16>, vector<8x256xf32> -> vector<8x256xf32>
    %c3_71 = arith.constant 3 : index
    %c0_72 = arith.constant 0 : index
    %102 = vector.load %arg11[%c3_71, %c0_72] : memref<7x256xf32, #tpu.memory_space<vmem>>, vector<1x256xf32>
    %103 = vector.broadcast %102 : vector<1x256xf32> to vector<8x256xf32>
    %104 = arith.addf %101, %103 : vector<8x256xf32>
    %c0_73 = arith.constant 0 : index
    %c3_74 = arith.constant 3 : index
    %c0_75 = arith.constant 0 : index
    %105 = vector.load %arg12[%c0_73, %c3_74, %c0_75] : memref<8x7x256xf32, #tpu.memory_space<vmem>>, vector<8x1x256xf32>
    %106 = vector.shape_cast %105 : vector<8x1x256xf32> to vector<8x256xf32>
    %107 = vector.shape_cast %104 : vector<8x256xf32> to vector<8x1x256xf32>
    tpu.vector_store %arg12[%c0_73, %c3_74, %c0_75], %107 {strides = array<i32>} : memref<8x7x256xf32, #tpu.memory_space<vmem>>, vector<8x1x256xf32>,
    %108 = vector.extract_strided_slice %27 {offsets = [0, 256], sizes = [8, 64], strides = [1, 1]} : vector<8x512xf32> to vector<8x64xf32>
    %109 = arith.truncf %108 : vector<8x64xf32> to vector<8x64xbf16>
    %c4 = arith.constant 4 : index
    %c0_76 = arith.constant 0 : index
    %c0_77 = arith.constant 0 : index
    %110 = vector.load %arg8[%c4, %c0_76, %c0_77] : memref<7x64x64xbf16, #tpu.memory_space<vmem>>, vector<1x64x64xbf16>
    %111 = vector.shape_cast %110 : vector<1x64x64xbf16> to vector<64x64xbf16>
    %cst_78 = arith.constant dense<0.000000e+00> : vector<8x64xf32>
    %112 = tpu.matmul %109, %111, %cst_78 {dimension_numbers = #tpu.dot_dimension_numbers<[1], [0], [0], [1], [0, 0, 1, 1], [], []>} : vector<8x64xbf16>, vector<64x64xbf16>, vector<8x64xf32> -> vector<8x64xf32>
    %c4_79 = arith.constant 4 : index
    %c0_80 = arith.constant 0 : index
    %113 = vector.load %arg9[%c4_79, %c0_80] : memref<7x64xf32, #tpu.memory_space<vmem>>, vector<1x64xf32>
    %114 = vector.broadcast %113 : vector<1x64xf32> to vector<8x64xf32>
    %115 = arith.addf %112, %114 : vector<8x64xf32>
    %cst_81 = arith.constant 0.000000e+00 : f32
    %116 = vector.broadcast %cst_81 : f32 to vector<8x64xf32>
    %117 = arith.maximumf %115, %116 : vector<8x64xf32>
    %118 = arith.truncf %117 : vector<8x64xf32> to vector<8x64xbf16>
    %c4_82 = arith.constant 4 : index
    %c0_83 = arith.constant 0 : index
    %c0_84 = arith.constant 0 : index
    %119 = vector.load %arg10[%c4_82, %c0_83, %c0_84] : memref<7x64x256xbf16, #tpu.memory_space<vmem>>, vector<1x64x256xbf16>
    %120 = vector.shape_cast %119 : vector<1x64x256xbf16> to vector<64x256xbf16>
    %cst_85 = arith.constant dense<0.000000e+00> : vector<8x256xf32>
    %121 = tpu.matmul %118, %120, %cst_85 {dimension_numbers = #tpu.dot_dimension_numbers<[1], [0], [0], [1], [0, 0, 1, 1], [], []>} : vector<8x64xbf16>, vector<64x256xbf16>, vector<8x256xf32> -> vector<8x256xf32>
    %c4_86 = arith.constant 4 : index
    %c0_87 = arith.constant 0 : index
    %122 = vector.load %arg11[%c4_86, %c0_87] : memref<7x256xf32, #tpu.memory_space<vmem>>, vector<1x256xf32>
    %123 = vector.broadcast %122 : vector<1x256xf32> to vector<8x256xf32>
    %124 = arith.addf %121, %123 : vector<8x256xf32>
    %c0_88 = arith.constant 0 : index
    %c4_89 = arith.constant 4 : index
    %c0_90 = arith.constant 0 : index
    %125 = vector.load %arg12[%c0_88, %c4_89, %c0_90] : memref<8x7x256xf32, #tpu.memory_space<vmem>>, vector<8x1x256xf32>
    %126 = vector.shape_cast %125 : vector<8x1x256xf32> to vector<8x256xf32>
    %127 = vector.shape_cast %124 : vector<8x256xf32> to vector<8x1x256xf32>
    tpu.vector_store %arg12[%c0_88, %c4_89, %c0_90], %127 {strides = array<i32>} : memref<8x7x256xf32, #tpu.memory_space<vmem>>, vector<8x1x256xf32>,
    %128 = vector.extract_strided_slice %27 {offsets = [0, 320], sizes = [8, 64], strides = [1, 1]} : vector<8x512xf32> to vector<8x64xf32>
    %129 = arith.truncf %128 : vector<8x64xf32> to vector<8x64xbf16>
    %c5 = arith.constant 5 : index
    %c0_91 = arith.constant 0 : index
    %c0_92 = arith.constant 0 : index
    %130 = vector.load %arg8[%c5, %c0_91, %c0_92] : memref<7x64x64xbf16, #tpu.memory_space<vmem>>, vector<1x64x64xbf16>
    %131 = vector.shape_cast %130 : vector<1x64x64xbf16> to vector<64x64xbf16>
    %cst_93 = arith.constant dense<0.000000e+00> : vector<8x64xf32>
    %132 = tpu.matmul %129, %131, %cst_93 {dimension_numbers = #tpu.dot_dimension_numbers<[1], [0], [0], [1], [0, 0, 1, 1], [], []>} : vector<8x64xbf16>, vector<64x64xbf16>, vector<8x64xf32> -> vector<8x64xf32>
    %c5_94 = arith.constant 5 : index
    %c0_95 = arith.constant 0 : index
    %133 = vector.load %arg9[%c5_94, %c0_95] : memref<7x64xf32, #tpu.memory_space<vmem>>, vector<1x64xf32>
    %134 = vector.broadcast %133 : vector<1x64xf32> to vector<8x64xf32>
    %135 = arith.addf %132, %134 : vector<8x64xf32>
    %cst_96 = arith.constant 0.000000e+00 : f32
    %136 = vector.broadcast %cst_96 : f32 to vector<8x64xf32>
    %137 = arith.maximumf %135, %136 : vector<8x64xf32>
    %138 = arith.truncf %137 : vector<8x64xf32> to vector<8x64xbf16>
    %c5_97 = arith.constant 5 : index
    %c0_98 = arith.constant 0 : index
    %c0_99 = arith.constant 0 : index
    %139 = vector.load %arg10[%c5_97, %c0_98, %c0_99] : memref<7x64x256xbf16, #tpu.memory_space<vmem>>, vector<1x64x256xbf16>
    %140 = vector.shape_cast %139 : vector<1x64x256xbf16> to vector<64x256xbf16>
    %cst_100 = arith.constant dense<0.000000e+00> : vector<8x256xf32>
    %141 = tpu.matmul %138, %140, %cst_100 {dimension_numbers = #tpu.dot_dimension_numbers<[1], [0], [0], [1], [0, 0, 1, 1], [], []>} : vector<8x64xbf16>, vector<64x256xbf16>, vector<8x256xf32> -> vector<8x256xf32>
    %c5_101 = arith.constant 5 : index
    %c0_102 = arith.constant 0 : index
    %142 = vector.load %arg11[%c5_101, %c0_102] : memref<7x256xf32, #tpu.memory_space<vmem>>, vector<1x256xf32>
    %143 = vector.broadcast %142 : vector<1x256xf32> to vector<8x256xf32>
    %144 = arith.addf %141, %143 : vector<8x256xf32>
    %c0_103 = arith.constant 0 : index
    %c5_104 = arith.constant 5 : index
    %c0_105 = arith.constant 0 : index
    %145 = vector.load %arg12[%c0_103, %c5_104, %c0_105] : memref<8x7x256xf32, #tpu.memory_space<vmem>>, vector<8x1x256xf32>
    %146 = vector.shape_cast %145 : vector<8x1x256xf32> to vector<8x256xf32>
    %147 = vector.shape_cast %144 : vector<8x256xf32> to vector<8x1x256xf32>
    tpu.vector_store %arg12[%c0_103, %c5_104, %c0_105], %147 {strides = array<i32>} : memref<8x7x256xf32, #tpu.memory_space<vmem>>, vector<8x1x256xf32>,
    %148 = vector.extract_strided_slice %27 {offsets = [0, 384], sizes = [8, 64], strides = [1, 1]} : vector<8x512xf32> to vector<8x64xf32>
    %149 = arith.truncf %148 : vector<8x64xf32> to vector<8x64xbf16>
    %c6 = arith.constant 6 : index
    %c0_106 = arith.constant 0 : index
    %c0_107 = arith.constant 0 : index
    %150 = vector.load %arg8[%c6, %c0_106, %c0_107] : memref<7x64x64xbf16, #tpu.memory_space<vmem>>, vector<1x64x64xbf16>
    %151 = vector.shape_cast %150 : vector<1x64x64xbf16> to vector<64x64xbf16>
    %cst_108 = arith.constant dense<0.000000e+00> : vector<8x64xf32>
    %152 = tpu.matmul %149, %151, %cst_108 {dimension_numbers = #tpu.dot_dimension_numbers<[1], [0], [0], [1], [0, 0, 1, 1], [], []>} : vector<8x64xbf16>, vector<64x64xbf16>, vector<8x64xf32> -> vector<8x64xf32>
    %c6_109 = arith.constant 6 : index
    %c0_110 = arith.constant 0 : index
    %153 = vector.load %arg9[%c6_109, %c0_110] : memref<7x64xf32, #tpu.memory_space<vmem>>, vector<1x64xf32>
    %154 = vector.broadcast %153 : vector<1x64xf32> to vector<8x64xf32>
    %155 = arith.addf %152, %154 : vector<8x64xf32>
    %cst_111 = arith.constant 0.000000e+00 : f32
    %156 = vector.broadcast %cst_111 : f32 to vector<8x64xf32>
    %157 = arith.maximumf %155, %156 : vector<8x64xf32>
    %158 = arith.truncf %157 : vector<8x64xf32> to vector<8x64xbf16>
    %c6_112 = arith.constant 6 : index
    %c0_113 = arith.constant 0 : index
    %c0_114 = arith.constant 0 : index
    %159 = vector.load %arg10[%c6_112, %c0_113, %c0_114] : memref<7x64x256xbf16, #tpu.memory_space<vmem>>, vector<1x64x256xbf16>
    %160 = vector.shape_cast %159 : vector<1x64x256xbf16> to vector<64x256xbf16>
    %cst_115 = arith.constant dense<0.000000e+00> : vector<8x256xf32>
    %161 = tpu.matmul %158, %160, %cst_115 {dimension_numbers = #tpu.dot_dimension_numbers<[1], [0], [0], [1], [0, 0, 1, 1], [], []>} : vector<8x64xbf16>, vector<64x256xbf16>, vector<8x256xf32> -> vector<8x256xf32>
    %c6_116 = arith.constant 6 : index
    %c0_117 = arith.constant 0 : index
    %162 = vector.load %arg11[%c6_116, %c0_117] : memref<7x256xf32, #tpu.memory_space<vmem>>, vector<1x256xf32>
    %163 = vector.broadcast %162 : vector<1x256xf32> to vector<8x256xf32>
    %164 = arith.addf %161, %163 : vector<8x256xf32>
    %c0_118 = arith.constant 0 : index
    %c6_119 = arith.constant 6 : index
    %c0_120 = arith.constant 0 : index
    %165 = vector.load %arg12[%c0_118, %c6_119, %c0_120] : memref<8x7x256xf32, #tpu.memory_space<vmem>>, vector<8x1x256xf32>
    %166 = vector.shape_cast %165 : vector<8x1x256xf32> to vector<8x256xf32>
    %167 = vector.shape_cast %164 : vector<8x256xf32> to vector<8x1x256xf32>
    tpu.vector_store %arg12[%c0_118, %c6_119, %c0_120], %167 {strides = array<i32>} : memref<8x7x256xf32, #tpu.memory_space<vmem>>, vector<8x1x256xf32>,
    return
  }
  func.func @transform_0(%arg0: i32) -> (i32, i32) {
    %c0_i32 = arith.constant 0 : i32
    %c0_i32_0 = arith.constant 0 : i32
    return %arg0, %c0_i32 : i32, i32
  }
  func.func @transform_1(%arg0: i32) -> (i32, i32) {
    %c0_i32 = arith.constant 0 : i32
    %c0_i32_0 = arith.constant 0 : i32
    return %arg0, %c0_i32 : i32, i32
  }
  func.func @transform_2(%arg0: i32) -> (i32, i32) {
    %c0_i32 = arith.constant 0 : i32
    %c0_i32_0 = arith.constant 0 : i32
    %c0_i32_1 = arith.constant 0 : i32
    return %c0_i32, %c0_i32_0 : i32, i32
  }
  func.func @transform_3(%arg0: i32) -> (i32, i32) {
    %c0_i32 = arith.constant 0 : i32
    %c0_i32_0 = arith.constant 0 : i32
    %c0_i32_1 = arith.constant 0 : i32
    return %c0_i32, %c0_i32_0 : i32, i32
  }
  func.func @transform_4(%arg0: i32) -> (i32, i32) {
    %c0_i32 = arith.constant 0 : i32
    %c0_i32_0 = arith.constant 0 : i32
    %c0_i32_1 = arith.constant 0 : i32
    return %c0_i32, %c0_i32_0 : i32, i32
  }
  func.func @transform_5(%arg0: i32) -> (i32, i32) {
    %c0_i32 = arith.constant 0 : i32
    %c0_i32_0 = arith.constant 0 : i32
    %c0_i32_1 = arith.constant 0 : i32
    return %c0_i32, %c0_i32_0 : i32, i32
  }
  func.func @transform_6(%arg0: i32) -> (i32, i32) {
    %c0_i32 = arith.constant 0 : i32
    %c0_i32_0 = arith.constant 0 : i32
    %c0_i32_1 = arith.constant 0 : i32
    return %c0_i32, %c0_i32_0 : i32, i32
  }
  func.func @transform_7(%arg0: i32) -> (i32, i32, i32) {
    %c0_i32 = arith.constant 0 : i32
    %c0_i32_0 = arith.constant 0 : i32
    %c0_i32_1 = arith.constant 0 : i32
    %c0_i32_2 = arith.constant 0 : i32
    return %c0_i32, %c0_i32_0, %c0_i32_1 : i32, i32, i32
  }
  func.func @transform_8(%arg0: i32) -> (i32, i32) {
    %c0_i32 = arith.constant 0 : i32
    %c0_i32_0 = arith.constant 0 : i32
    %c0_i32_1 = arith.constant 0 : i32
    return %c0_i32, %c0_i32_0 : i32, i32
  }
  func.func @transform_9(%arg0: i32) -> (i32, i32, i32) {
    %c0_i32 = arith.constant 0 : i32
    %c0_i32_0 = arith.constant 0 : i32
    %c0_i32_1 = arith.constant 0 : i32
    %c0_i32_2 = arith.constant 0 : i32
    return %c0_i32, %c0_i32_0, %c0_i32_1 : i32, i32, i32
  }
  func.func @transform_10(%arg0: i32) -> (i32, i32) {
    %c0_i32 = arith.constant 0 : i32
    %c0_i32_0 = arith.constant 0 : i32
    %c0_i32_1 = arith.constant 0 : i32
    return %c0_i32, %c0_i32_0 : i32, i32
  }
  func.func @transform_11(%arg0: i32) -> (i32, i32, i32) {
    %c0_i32 = arith.constant 0 : i32
    %c0_i32_0 = arith.constant 0 : i32
    %c0_i32_1 = arith.constant 0 : i32
    return %arg0, %c0_i32, %c0_i32_0 : i32, i32, i32
  }
}

</mosaic_0001>

<llo_original>
// kernel: tpu_custom_call.1
$region0: #{tpu_custom_call.1}
  #allocation0 [shape = 'u32[]', space=smem, size = 0x4, offset = 0x4, fixed_abs, tag = 'smem constant byte address 0x4 - core index']
  #allocation1 [shape = 'u32[144,128]{1,0:T(1,128)}', space=vmem, size = 0x12000, scoped, tag = 'internal scratch']
  %s0 = inlined_call_operand.vmem [shape: f32[8,1], index: 0, kind: input, shape index: {}]
  %s1 = inlined_call_operand.vmem [shape: f32[8,1], index: 1, kind: input, shape index: {}]
  %s2 = inlined_call_operand.vmem [shape: f32[1,32], index: 2, kind: input, shape index: {}]
  %s3 = inlined_call_operand.vmem [shape: f32[1,32], index: 3, kind: input, shape index: {}]
  %s4 = inlined_call_operand.hbm [shape: bf16[32,512], index: 4, kind: input, shape index: {}]
  %s5 = inlined_call_operand.hbm [shape: bf16[32,512], index: 5, kind: input, shape index: {}]
  %s6 = inlined_call_operand.vmem [shape: f32[1,512], index: 6, kind: input, shape index: {}]
  %s7 = inlined_call_operand.hbm [shape: bf16[7,64,64], index: 7, kind: input, shape index: {}]
  %s8 = inlined_call_operand.vmem [shape: f32[7,64], index: 8, kind: input, shape index: {}]
  %s9 = inlined_call_operand.hbm [shape: bf16[7,64,256], index: 9, kind: input, shape index: {}]
  %s10 = inlined_call_operand.vmem [shape: f32[7,256], index: 10, kind: input, shape index: {}]
  %s11 = inlined_call_operand.vmem [shape: f32[8,7,256], index: 11, kind: output, shape index: {}]
  %s12 = sld [smem:[#allocation0]]
  $region70: #{tpu_custom_call.1} parent=0
    _
  %s14 = ssub.s32 1, %s12
  %s15 = scalar_select 0, %s14, %s12
  $region1: #{tpu_custom_call.1} parent=0
    #allocation2 [shape = 'u8[32768]{0}', space=vmem, size = 0x8000, scoped, tag = 'input window, operand 4, single buffered']
    #allocation3 [shape = 's32[1]{0}', space=sflag, size = 0x4, scoped, tag = 'scoped memory for tpu_custom_call.1']
    #allocation4 [shape = 'u8[32768]{0}', space=vmem, size = 0x8000, scoped, tag = 'input window, operand 5, single buffered']
    #allocation5 [shape = 's32[1]{0}', space=sflag, size = 0x4, scoped, tag = 'scoped memory for tpu_custom_call.1']
    #allocation6 [shape = 'u8[114688]{0}', space=vmem, size = 0x1c000, scoped, tag = 'input window, operand 7, single buffered']
    #allocation7 [shape = 'u8[229376]{0}', space=vmem, size = 0x38000, scoped, tag = 'input window, operand 9, single buffered']
    #allocation8 [shape = 's32[1]{0}', space=sflag, size = 0x4, scoped, tag = 'scoped memory for tpu_custom_call.1']
    %16 = vsyncpa [#allocation3], 0
    %17 = vsyncpa [#allocation5], 0
    %18 = vsyncpa [#allocation8], 0
    // Predicated region
    $region2: #{tpu_custom_call.1} parent=1 // pred_check
      _
    $region3: #{tpu_custom_call.1} parent=1 // pred_check_branch
      %20 = sbr.rel (0) target = $region5
    $region4: #{tpu_custom_call.1} parent=1 // pred_region
      _
    $region5: #{tpu_custom_call.1} parent=1 // pred_fallthru
      _
    // Predicated region
    $region6: #{tpu_custom_call.1} parent=1 // pred_check
      _
    $region7: #{tpu_custom_call.1} parent=1 // pred_check_branch
      %22 = sbr.rel (0) target = $region9
    $region8: #{tpu_custom_call.1} parent=1 // pred_region
      _
    $region9: #{tpu_custom_call.1} parent=1 // pred_fallthru
      _
    // Predicated region
    $region10: #{tpu_custom_call.1} parent=1 // pred_check
      _
    $region11: #{tpu_custom_call.1} parent=1 // pred_check_branch
      %24 = sbr.rel (0) target = $region13
    $region12: #{tpu_custom_call.1} parent=1 // pred_region
      _
    $region13: #{tpu_custom_call.1} parent=1 // pred_fallthru
      _
    // Predicated region
    $region14: #{tpu_custom_call.1} parent=1 // pred_check
      _
    $region15: #{tpu_custom_call.1} parent=1 // pred_check_branch
      %26 = sbr.rel (0) target = $region17
    $region16: #{tpu_custom_call.1} parent=1 // pred_region
      _
    $region17: #{tpu_custom_call.1} parent=1 // pred_fallthru
      _
    // Predicated region
    $region18: #{tpu_custom_call.1} parent=1 // pred_check
      _
    $region19: #{tpu_custom_call.1} parent=1 // pred_check_branch
      %28 = sbr.rel (0) target = $region21
    $region20: #{tpu_custom_call.1} parent=1 // pred_region
      %s30 = ssub.s32 1024, 1024
      %31 = vsyncadd [#allocation3], %s30
      %s32 = sshll.u32 [#allocation2], 4
      %s33 = int_to_ptr.vmem [resolvable:$true] %s32
      %38 = dma.hbm_to_vmem [thread:$0]  %s4, 1024, %s33, [#allocation3], 256, 256, 16
    $region21: #{tpu_custom_call.1} parent=1 // pred_fallthru
      _
    // Predicated region
    $region22: #{tpu_custom_call.1} parent=1 // pred_check
      _
    $region23: #{tpu_custom_call.1} parent=1 // pred_check_branch
      %40 = sbr.rel (0) target = $region25
    $region24: #{tpu_custom_call.1} parent=1 // pred_region
      %s42 = ssub.s32 1024, 1024
      %43 = vsyncadd [#allocation5], %s42
      %s44 = sshll.u32 [#allocation4], 4
      %s45 = int_to_ptr.vmem [resolvable:$true] %s44
      %50 = dma.hbm_to_vmem [thread:$0]  %s5, 1024, %s45, [#allocation5], 256, 256, 16
    $region25: #{tpu_custom_call.1} parent=1 // pred_fallthru
      _
    // Predicated region
    $region26: #{tpu_custom_call.1} parent=1 // pred_check
      _
    $region27: #{tpu_custom_call.1} parent=1 // pred_check_branch
      %52 = sbr.rel (0) target = $region29
    $region28: #{tpu_custom_call.1} parent=1 // pred_region
      _
    $region29: #{tpu_custom_call.1} parent=1 // pred_fallthru
      _
    // Predicated region
    $region30: #{tpu_custom_call.1} parent=1 // pred_check
      _
    $region31: #{tpu_custom_call.1} parent=1 // pred_check_branch
      %54 = sbr.rel (0) target = $region33
    $region32: #{tpu_custom_call.1} parent=1 // pred_region
      %s56 = ssub.s32 3584, 3584
      %57 = vsyncadd [#allocation5], %s56
      %s58 = sshll.u32 [#allocation6], 4
      %s59 = int_to_ptr.vmem [resolvable:$true] %s58
      %64 = dma.hbm_to_vmem [thread:$0]  %s7, 3584, %s59, [#allocation5], 64, 64, 4
    $region33: #{tpu_custom_call.1} parent=1 // pred_fallthru
      _
    // Predicated region
    $region34: #{tpu_custom_call.1} parent=1 // pred_check
      _
    $region35: #{tpu_custom_call.1} parent=1 // pred_check_branch
      %66 = sbr.rel (0) target = $region37
    $region36: #{tpu_custom_call.1} parent=1 // pred_region
      _
    $region37: #{tpu_custom_call.1} parent=1 // pred_fallthru
      _
    // Predicated region
    $region38: #{tpu_custom_call.1} parent=1 // pred_check
      _
    $region39: #{tpu_custom_call.1} parent=1 // pred_check_branch
      %68 = sbr.rel (0) target = $region41
    $region40: #{tpu_custom_call.1} parent=1 // pred_region
      %s70 = ssub.s32 7168, 7168
      %71 = vsyncadd [#allocation8], %s70
      %s72 = sshll.u32 [#allocation7], 4
      %s73 = int_to_ptr.vmem [resolvable:$true] %s72
      %78 = dma.hbm_to_vmem [thread:$0]  %s9, 7168, %s73, [#allocation8], 128, 128, 8
    $region41: #{tpu_custom_call.1} parent=1 // pred_fallthru
      _
    // Predicated region
    $region42: #{tpu_custom_call.1} parent=1 // pred_check
      _
    $region43: #{tpu_custom_call.1} parent=1 // pred_check_branch
      %80 = sbr.rel (0) target = $region45
    $region44: #{tpu_custom_call.1} parent=1 // pred_region
      _
    $region45: #{tpu_custom_call.1} parent=1 // pred_fallthru
      _
    // Predicated region
    $region46: #{tpu_custom_call.1} parent=1 // pred_check
      _
    $region47: #{tpu_custom_call.1} parent=1 // pred_check_branch
      %82 = sbr.rel (0) target = $region49
    $region48: #{tpu_custom_call.1} parent=1 // pred_region
      %83 = dma.done [#allocation3], 1024
    $region49: #{tpu_custom_call.1} parent=1 // pred_fallthru
      _
    // Predicated region
    $region50: #{tpu_custom_call.1} parent=1 // pred_check
      _
    $region51: #{tpu_custom_call.1} parent=1 // pred_check_branch
      %85 = sbr.rel (0) target = $region53
    $region52: #{tpu_custom_call.1} parent=1 // pred_region
      %86 = dma.done [#allocation5], 1024
    $region53: #{tpu_custom_call.1} parent=1 // pred_fallthru
      _
    // Predicated region
    $region54: #{tpu_custom_call.1} parent=1 // pred_check
      _
    $region55: #{tpu_custom_call.1} parent=1 // pred_check_branch
      %88 = sbr.rel (0) target = $region57
    $region56: #{tpu_custom_call.1} parent=1 // pred_region
      %89 = dma.done [#allocation5], 3584
    $region57: #{tpu_custom_call.1} parent=1 // pred_fallthru
      _
    // Predicated region
    $region58: #{tpu_custom_call.1} parent=1 // pred_check
      _
    $region59: #{tpu_custom_call.1} parent=1 // pred_check_branch
      %91 = sbr.rel (0) target = $region61
    $region60: #{tpu_custom_call.1} parent=1 // pred_region
      %92 = dma.done [#allocation8], 7168
    $region61: #{tpu_custom_call.1} parent=1 // pred_fallthru
      _
    %v94 = vld [vmem:[%s2] sm:$0x1]
    %v95 = vld [vmem:[%s3] sm:$0x1]
    %v96 = vld [vmem:[%s0] sm:$0xff]
    %98 = vset.pattern.permute.xlu0 0
    %99 = vperm.xlu0 %98, %v96
    %v100 = vpop.permute.xlu0 %99
    %v103 = vlaneseq
    %v104 = vshrl.u32 %v103, 7
    %v105 = vsub.s32 0, %v104
    %v106 = vrot.slane %v94, %v105
    %v108 = vmul.f32 %v100, %v106
    %v110 = vlaneseq
    %v111 = vshrl.u32 %v110, 7
    %v112 = vsub.s32 0, %v111
    %v113 = vrot.slane %v95, %v112
    %v115 = vadd.f32 %v108, %v113
    %v116 = vtanh.pop %v115
    %v117 = vpack.c.bf16 %v116, %v116
    %v118 = vld [vmem:[%s1] sm:$0xff]
    %120 = vset.pattern.permute.xlu0 0
    %121 = vperm.xlu0 %120, %v118
    %v122 = vpop.permute.xlu0 %121
    %v124 = vmul.f32 %v122, %v106
    %v125 = vadd.f32 %v124, %v113
    %v126 = vtanh.pop %v125
    %v127 = vpack.c.bf16 %v126, %v126
    %v128 = vld [vmem:[#allocation2] sm:$0xff]
    %v129 = vld [vmem:[#allocation2 + $0x8] sm:$0xff]
    %v130 = vld [vmem:[#allocation2 + $0x10] sm:$0xff]
    %v131 = vld [vmem:[#allocation2 + $0x18] sm:$0xff]
    %v132 = vld [vmem:[#allocation2 + $0x20] sm:$0xff]
    %v133 = vld [vmem:[#allocation2 + $0x28] sm:$0xff]
    %v134 = vld [vmem:[#allocation2 + $0x30] sm:$0xff]
    %v135 = vld [vmem:[#allocation2 + $0x38] sm:$0xff]
    %v136 = vld [vmem:[#allocation4] sm:$0xff]
    %v137 = vld [vmem:[#allocation4 + $0x8] sm:$0xff]
    %v138 = vld [vmem:[#allocation4 + $0x10] sm:$0xff]
    %v139 = vld [vmem:[#allocation4 + $0x18] sm:$0xff]
    %v140 = vld [vmem:[#allocation4 + $0x20] sm:$0xff]
    %v141 = vld [vmem:[#allocation4 + $0x28] sm:$0xff]
    %v142 = vld [vmem:[#allocation4 + $0x30] sm:$0xff]
    %v143 = vld [vmem:[#allocation4 + $0x38] sm:$0xff]
    %v152 = vunpack.c.l.b16 %v136
    %v153 = vunpack.c.h.b16 %v136
    %v154 = vunpack.c.l.b16 %v137
    %v155 = vunpack.c.h.b16 %v137
    %v156 = vunpack.c.l.b16 %v138
    %v157 = vunpack.c.h.b16 %v138
    %v158 = vunpack.c.l.b16 %v139
    %v159 = vunpack.c.h.b16 %v139
    %v160 = vunpack.c.l.b16 %v140
    %v161 = vunpack.c.h.b16 %v140
    %v162 = vunpack.c.l.b16 %v141
    %v163 = vunpack.c.h.b16 %v141
    %v164 = vunpack.c.l.b16 %v142
    %v165 = vunpack.c.h.b16 %v142
    %v166 = vunpack.c.l.b16 %v143
    %v167 = vunpack.c.h.b16 %v143
    %v168 = vpack.c.b16 %v156, %v152
    %v169 = vpack.c.b16 %v157, %v153
    %v170 = vpack.c.b16 %v158, %v154
    %v171 = vpack.c.b16 %v159, %v155
    %v172 = vpack.c.b16 %v164, %v160
    %v173 = vpack.c.b16 %v165, %v161
    %v174 = vpack.c.b16 %v166, %v162
    %v175 = vpack.c.b16 %v167, %v163
    %vm184 = vcmask 261120
    %v186 = vsel %vm184, %v127, 0
    %188 = vmatprep.subr.bf16.mxu0 %v169
    %189 = vmatpush1.bf16.msra.mxu0 %v168
    %190 = vmatprep.subr.bf16.mxu0 %v173
    %191 = vmatpush1.bf16.msra.mxu0 %v172
    %192 = vmatprep.subr.bf16.mxu0 0
    %193 = vmatpush1.bf16.msra.mxu0 0
    %194 = vmatprep.subr.bf16.mxu0 0
    %195 = vmatpush1.bf16.msra.mxu0 0
    %196 = vmatprep.subr.bf16.mxu0 0
    %197 = vmatpush1.bf16.msra.mxu0 0
    %198 = vmatprep.subr.bf16.mxu0 0
    %199 = vmatpush1.bf16.msra.mxu0 0
    %200 = vmatprep.subr.bf16.mxu0 0
    %201 = vmatpush1.bf16.msra.mxu0 0
    %202 = vmatprep.subr.bf16.mxu0 0
    %203 = vmatpush1.bf16.msra.mxu0 0
    %204 = vmatprep.subr.bf16.mxu0 0
    %205 = vmatpush1.bf16.msra.mxu0 0
    %206 = vmatprep.subr.bf16.mxu0 0
    %207 = vmatpush1.bf16.msra.mxu0 0
    %208 = vmatprep.subr.bf16.mxu0 0
    %209 = vmatpush1.bf16.msra.mxu0 0
    %210 = vmatprep.subr.bf16.mxu0 0
    %211 = vmatpush1.bf16.msra.mxu0 0
    %212 = vmatprep.subr.bf16.mxu0 0
    %213 = vmatpush1.bf16.msra.mxu0 0
    %214 = vmatprep.subr.bf16.mxu0 0
    %215 = vmatpush1.bf16.msra.mxu0 0
    %216 = vmatprep.subr.bf16.mxu0 0
    %217 = vmatpush1.bf16.msra.mxu0 0
    %218 = vmatprep.subr.bf16.mxu0 0
    %219 = vmatpush1.bf16.msra.mxu0 0
    %220 = vmatprep.mubr.bf16.mxu0 0
    %221 = vmatmul.mubr.bf16.gmra.mrb[0].mxu0 %v186
    %v222 = vpop.f32.mrb[0].mxu0
    %v223 = vadd.f32 0.0, %v222
    %v224 = vpop.f32.mrb[0].mxu0
    %v225 = vadd.f32 0.0, %v224
    %v226 = vpop.f32.mrb[0].mxu0
    %v227 = vpop.f32.mrb[0].mxu0
    %228 = vdwg.mxu0
    %229 = vmatprep.subr.bf16.mxu0 %v171
    %230 = vmatpush1.bf16.msra.mxu0 %v170
    %231 = vmatprep.subr.bf16.mxu0 %v175
    %232 = vmatpush1.bf16.msra.mxu0 %v174
    %233 = vmatprep.subr.bf16.mxu0 0
    %234 = vmatpush1.bf16.msra.mxu0 0
    %235 = vmatprep.subr.bf16.mxu0 0
    %236 = vmatpush1.bf16.msra.mxu0 0
    %237 = vmatprep.subr.bf16.mxu0 0
    %238 = vmatpush1.bf16.msra.mxu0 0
    %239 = vmatprep.subr.bf16.mxu0 0
    %240 = vmatpush1.bf16.msra.mxu0 0
    %241 = vmatprep.subr.bf16.mxu0 0
    %242 = vmatpush1.bf16.msra.mxu0 0
    %243 = vmatprep.subr.bf16.mxu0 0
    %244 = vmatpush1.bf16.msra.mxu0 0
    %245 = vmatprep.subr.bf16.mxu0 0
    %246 = vmatpush1.bf16.msra.mxu0 0
    %247 = vmatprep.subr.bf16.mxu0 0
    %248 = vmatpush1.bf16.msra.mxu0 0
    %249 = vmatprep.subr.bf16.mxu0 0
    %250 = vmatpush1.bf16.msra.mxu0 0
    %251 = vmatprep.subr.bf16.mxu0 0
    %252 = vmatpush1.bf16.msra.mxu0 0
    %253 = vmatprep.subr.bf16.mxu0 0
    %254 = vmatpush1.bf16.msra.mxu0 0
    %255 = vmatprep.subr.bf16.mxu0 0
    %256 = vmatpush1.bf16.msra.mxu0 0
    %257 = vmatprep.subr.bf16.mxu0 0
    %258 = vmatpush1.bf16.msra.mxu0 0
    %259 = vmatprep.subr.bf16.mxu0 0
    %260 = vmatpush1.bf16.msra.mxu0 0
    %261 = vmatprep.mubr.bf16.mxu0 0
    %262 = vmatmul.mubr.bf16.gmra.mrb[0].mxu0 %v186
    %v263 = vpop.f32.mrb[0].mxu0
    %v264 = vadd.f32 0.0, %v263
    %v265 = vpop.f32.mrb[0].mxu0
    %v266 = vadd.f32 0.0, %v265
    %v267 = vpop.f32.mrb[0].mxu0
    %v268 = vpop.f32.mrb[0].mxu0
    %269 = vdwg.mxu0
    %v278 = vunpack.c.l.b16 %v128
    %v279 = vunpack.c.h.b16 %v128
    %v280 = vunpack.c.l.b16 %v129
    %v281 = vunpack.c.h.b16 %v129
    %v282 = vunpack.c.l.b16 %v130
    %v283 = vunpack.c.h.b16 %v130
    %v284 = vunpack.c.l.b16 %v131
    %v285 = vunpack.c.h.b16 %v131
    %v286 = vunpack.c.l.b16 %v132
    %v287 = vunpack.c.h.b16 %v132
    %v288 = vunpack.c.l.b16 %v133
    %v289 = vunpack.c.h.b16 %v133
    %v290 = vunpack.c.l.b16 %v134
    %v291 = vunpack.c.h.b16 %v134
    %v292 = vunpack.c.l.b16 %v135
    %v293 = vunpack.c.h.b16 %v135
    %v294 = vpack.c.b16 %v282, %v278
    %v295 = vpack.c.b16 %v283, %v279
    %v296 = vpack.c.b16 %v284, %v280
    %v297 = vpack.c.b16 %v285, %v281
    %v298 = vpack.c.b16 %v290, %v286
    %v299 = vpack.c.b16 %v291, %v287
    %v300 = vpack.c.b16 %v292, %v288
    %v301 = vpack.c.b16 %v293, %v289
    %v311 = vsel %vm184, %v117, 0
    %313 = vmatprep.subr.bf16.mxu0 %v295
    %314 = vmatpush1.bf16.msra.mxu0 %v294
    %315 = vmatprep.subr.bf16.mxu0 %v299
    %316 = vmatpush1.bf16.msra.mxu0 %v298
    %317 = vmatprep.subr.bf16.mxu0 0
    %318 = vmatpush1.bf16.msra.mxu0 0
    %319 = vmatprep.subr.bf16.mxu0 0
    %320 = vmatpush1.bf16.msra.mxu0 0
    %321 = vmatprep.subr.bf16.mxu0 0
    %322 = vmatpush1.bf16.msra.mxu0 0
    %323 = vmatprep.subr.bf16.mxu0 0
    %324 = vmatpush1.bf16.msra.mxu0 0
    %325 = vmatprep.subr.bf16.mxu0 0
    %326 = vmatpush1.bf16.msra.mxu0 0
    %327 = vmatprep.subr.bf16.mxu0 0
    %328 = vmatpush1.bf16.msra.mxu0 0
    %329 = vmatprep.subr.bf16.mxu0 0
    %330 = vmatpush1.bf16.msra.mxu0 0
    %331 = vmatprep.subr.bf16.mxu0 0
    %332 = vmatpush1.bf16.msra.mxu0 0
    %333 = vmatprep.subr.bf16.mxu0 0
    %334 = vmatpush1.bf16.msra.mxu0 0
    %335 = vmatprep.subr.bf16.mxu0 0
    %336 = vmatpush1.bf16.msra.mxu0 0
    %337 = vmatprep.subr.bf16.mxu0 0
    %338 = vmatpush1.bf16.msra.mxu0 0
    %339 = vmatprep.subr.bf16.mxu0 0
    %340 = vmatpush1.bf16.msra.mxu0 0
    %341 = vmatprep.subr.bf16.mxu0 0
    %342 = vmatpush1.bf16.msra.mxu0 0
    %343 = vmatprep.subr.bf16.mxu0 0
    %344 = vmatpush1.bf16.msra.mxu0 0
    %345 = vmatprep.mubr.bf16.mxu0 0
    %346 = vmatmul.mubr.bf16.gmra.mrb[0].mxu0 %v311
    %v347 = vpop.f32.mrb[0].mxu0
    %v348 = vadd.f32 %v223, %v347
    %v349 = vpop.f32.mrb[0].mxu0
    %v350 = vadd.f32 %v225, %v349
    %v351 = vpop.f32.mrb[0].mxu0
    %v352 = vpop.f32.mrb[0].mxu0
    %353 = vdwg.mxu0
    %354 = vmatprep.subr.bf16.mxu0 %v297
    %355 = vmatpush1.bf16.msra.mxu0 %v296
    %356 = vmatprep.subr.bf16.mxu0 %v301
    %357 = vmatpush1.bf16.msra.mxu0 %v300
    %358 = vmatprep.subr.bf16.mxu0 0
    %359 = vmatpush1.bf16.msra.mxu0 0
    %360 = vmatprep.subr.bf16.mxu0 0
    %361 = vmatpush1.bf16.msra.mxu0 0
    %362 = vmatprep.subr.bf16.mxu0 0
    %363 = vmatpush1.bf16.msra.mxu0 0
    %364 = vmatprep.subr.bf16.mxu0 0
    %365 = vmatpush1.bf16.msra.mxu0 0
    %366 = vmatprep.subr.bf16.mxu0 0
    %367 = vmatpush1.bf16.msra.mxu0 0
    %368 = vmatprep.subr.bf16.mxu0 0
    %369 = vmatpush1.bf16.msra.mxu0 0
    %370 = vmatprep.subr.bf16.mxu0 0
    %371 = vmatpush1.bf16.msra.mxu0 0
    %372 = vmatprep.subr.bf16.mxu0 0
    %373 = vmatpush1.bf16.msra.mxu0 0
    %374 = vmatprep.subr.bf16.mxu0 0
    %375 = vmatpush1.bf16.msra.mxu0 0
    %376 = vmatprep.subr.bf16.mxu0 0
    %377 = vmatpush1.bf16.msra.mxu0 0
    %378 = vmatprep.subr.bf16.mxu0 0
    %379 = vmatpush1.bf16.msra.mxu0 0
    %380 = vmatprep.subr.bf16.mxu0 0
    %381 = vmatpush1.bf16.msra.mxu0 0
    %382 = vmatprep.subr.bf16.mxu0 0
    %383 = vmatpush1.bf16.msra.mxu0 0
    %384 = vmatprep.subr.bf16.mxu0 0
    %385 = vmatpush1.bf16.msra.mxu0 0
    %386 = vmatprep.mubr.bf16.mxu0 0
    %387 = vmatmul.mubr.bf16.gmra.mrb[0].mxu0 %v311
    %v388 = vpop.f32.mrb[0].mxu0
    %v389 = vadd.f32 %v264, %v388
    %v390 = vpop.f32.mrb[0].mxu0
    %v391 = vadd.f32 %v266, %v390
    %v392 = vpop.f32.mrb[0].mxu0
    %v393 = vpop.f32.mrb[0].mxu0
    %394 = vdwg.mxu0
    %v395 = vld [vmem:[%s6] sm:$0xf]
    %v397 = vlaneseq
    %v398 = vshrl.u32 %v397, 7
    %v399 = vsub.s32 0, %v398
    %v400 = vrot.slane %v395, %v399
    %v401 = vlaneseq
    %v402 = vshrl.u32 %v401, 7
    %v403 = vsub.s32 1, %v402
    %v404 = vrot.slane %v395, %v403
    %v405 = vlaneseq
    %v406 = vshrl.u32 %v405, 7
    %v407 = vsub.s32 2, %v406
    %v408 = vrot.slane %v395, %v407
    %v409 = vlaneseq
    %v410 = vshrl.u32 %v409, 7
    %v411 = vsub.s32 3, %v410
    %v412 = vrot.slane %v395, %v411
    %v417 = vadd.f32 %v348, %v400
    %v418 = vadd.f32 %v350, %v404
    %v419 = vadd.f32 %v389, %v408
    %v420 = vadd.f32 %v391, %v412
    %v421 = vmax.f32 %v417, 0.0
    %v422 = vmax.f32 %v418, 0.0
    %v423 = vmax.f32 %v419, 0.0
    %v424 = vmax.f32 %v420, 0.0
    %v425 = vpack.c.bf16 %v421, %v421
    %v426 = vld [vmem:[#allocation6] sm:$0xf]
    %v427 = vld [vmem:[#allocation6 + $0x4] sm:$0xf]
    %v428 = vld [vmem:[#allocation6 + $0x8] sm:$0xf]
    %v429 = vld [vmem:[#allocation6 + $0xc] sm:$0xf]
    %v430 = vld [vmem:[#allocation6 + $0x10] sm:$0xf]
    %v431 = vld [vmem:[#allocation6 + $0x14] sm:$0xf]
    %v432 = vld [vmem:[#allocation6 + $0x18] sm:$0xf]
    %v433 = vld [vmem:[#allocation6 + $0x1c] sm:$0xf]
    %v434 = vld [vmem:[%s8] sm:$0x1]
    %v435 = vlaneseq
    %v436 = vshrl.u32 %v435, 7
    %v437 = vsub.s32 0, %v436
    %v438 = vrot.slane %v434, %v437
    %v447 = vunpack.c.l.b16 %v426
    %v448 = vunpack.c.l.b16 %v427
    %v449 = vunpack.c.l.b16 %v428
    %v450 = vunpack.c.l.b16 %v429
    %v451 = vunpack.c.l.b16 %v430
    %v452 = vunpack.c.l.b16 %v431
    %v453 = vunpack.c.l.b16 %v432
    %v454 = vunpack.c.l.b16 %v433
    %v455 = vpack.c.b16 %v448, %v447
    %v456 = vpack.c.b16 %v450, %v449
    %v457 = vpack.c.b16 %v452, %v451
    %v458 = vpack.c.b16 %v454, %v453
    %vm463 = vcmask 523264
    %v465 = vsel %vm463, %v425, 0
    %467 = vmatprep.subr.bf16.mxu0 0
    %468 = vmatpush1.bf16.msra.mxu0 %v455
    %469 = vmatprep.subr.bf16.mxu0 0
    %470 = vmatpush1.bf16.msra.mxu0 %v456
    %471 = vmatprep.subr.bf16.mxu0 0
    %472 = vmatpush1.bf16.msra.mxu0 %v457
    %473 = vmatprep.subr.bf16.mxu0 0
    %474 = vmatpush1.bf16.msra.mxu0 %v458
    %475 = vmatprep.subr.bf16.mxu0 0
    %476 = vmatpush1.bf16.msra.mxu0 0
    %477 = vmatprep.subr.bf16.mxu0 0
    %478 = vmatpush1.bf16.msra.mxu0 0
    %479 = vmatprep.subr.bf16.mxu0 0
    %480 = vmatpush1.bf16.msra.mxu0 0
    %481 = vmatprep.subr.bf16.mxu0 0
    %482 = vmatpush1.bf16.msra.mxu0 0
    %483 = vmatprep.subr.bf16.mxu0 0
    %484 = vmatpush1.bf16.msra.mxu0 0
    %485 = vmatprep.subr.bf16.mxu0 0
    %486 = vmatpush1.bf16.msra.mxu0 0
    %487 = vmatprep.subr.bf16.mxu0 0
    %488 = vmatpush1.bf16.msra.mxu0 0
    %489 = vmatprep.subr.bf16.mxu0 0
    %490 = vmatpush1.bf16.msra.mxu0 0
    %491 = vmatprep.subr.bf16.mxu0 0
    %492 = vmatpush1.bf16.msra.mxu0 0
    %493 = vmatprep.subr.bf16.mxu0 0
    %494 = vmatpush1.bf16.msra.mxu0 0
    %495 = vmatprep.subr.bf16.mxu0 0
    %496 = vmatpush1.bf16.msra.mxu0 0
    %497 = vmatprep.subr.bf16.mxu0 0
    %498 = vmatpush1.bf16.msra.mxu0 0
    %499 = vmatprep.mubr.bf16.mxu0 0
    %500 = vmatmul.mubr.bf16.gmra.mrb[0].mxu0 %v465
    %v501 = vpop.f32.mrb[0].mxu0
    %v502 = vadd.f32 %v438, %v501
    %v503 = vpop.f32.mrb[0].mxu0
    %v504 = vpop.f32.mrb[0].mxu0
    %v505 = vpop.f32.mrb[0].mxu0
    %506 = vdwg.mxu0
    %v507 = vmax.f32 %v502, 0.0
    %v508 = vpack.c.bf16 %v507, %v507
    %v509 = vld [vmem:[#allocation7] sm:$0xff]
    %v510 = vld [vmem:[#allocation7 + $0x8] sm:$0xff]
    %v511 = vld [vmem:[#allocation7 + $0x10] sm:$0xff]
    %v512 = vld [vmem:[#allocation7 + $0x18] sm:$0xff]
    %v513 = vld [vmem:[#allocation7 + $0x20] sm:$0xff]
    %v514 = vld [vmem:[#allocation7 + $0x28] sm:$0xff]
    %v515 = vld [vmem:[#allocation7 + $0x30] sm:$0xff]
    %v516 = vld [vmem:[#allocation7 + $0x38] sm:$0xff]
    %v517 = vld [vmem:[%s10] ss:$8 sm:$0x3]
    %v519 = vlaneseq
    %v520 = vshrl.u32 %v519, 7
    %v521 = vsub.s32 0, %v520
    %v522 = vrot.slane %v517, %v521
    %v523 = vlaneseq
    %v524 = vshrl.u32 %v523, 7
    %v525 = vsub.s32 1, %v524
    %v526 = vrot.slane %v517, %v525
    %v537 = vunpack.c.l.b16 %v509
    %v538 = vunpack.c.h.b16 %v509
    %v539 = vunpack.c.l.b16 %v510
    %v540 = vunpack.c.h.b16 %v510
    %v541 = vunpack.c.l.b16 %v511
    %v542 = vunpack.c.h.b16 %v511
    %v543 = vunpack.c.l.b16 %v512
    %v544 = vunpack.c.h.b16 %v512
    %v545 = vunpack.c.l.b16 %v513
    %v546 = vunpack.c.h.b16 %v513
    %v547 = vunpack.c.l.b16 %v514
    %v548 = vunpack.c.h.b16 %v514
    %v549 = vunpack.c.l.b16 %v515
    %v550 = vunpack.c.h.b16 %v515
    %v551 = vunpack.c.l.b16 %v516
    %v552 = vunpack.c.h.b16 %v516
    %v553 = vpack.c.b16 %v539, %v537
    %v554 = vpack.c.b16 %v540, %v538
    %v555 = vpack.c.b16 %v543, %v541
    %v556 = vpack.c.b16 %v544, %v542
    %v557 = vpack.c.b16 %v547, %v545
    %v558 = vpack.c.b16 %v548, %v546
    %v559 = vpack.c.b16 %v551, %v549
    %v560 = vpack.c.b16 %v552, %v550
    %v570 = vsel %vm463, %v508, 0
    %572 = vmatprep.subr.bf16.mxu0 %v554
    %573 = vmatpush1.bf16.msra.mxu0 %v553
    %574 = vmatprep.subr.bf16.mxu0 %v556
    %575 = vmatpush1.bf16.msra.mxu0 %v555
    %576 = vmatprep.subr.bf16.mxu0 %v558
    %577 = vmatpush1.bf16.msra.mxu0 %v557
    %578 = vmatprep.subr.bf16.mxu0 %v560
    %579 = vmatpush1.bf16.msra.mxu0 %v559
    %580 = vmatprep.subr.bf16.mxu0 0
    %581 = vmatpush1.bf16.msra.mxu0 0
    %582 = vmatprep.subr.bf16.mxu0 0
    %583 = vmatpush1.bf16.msra.mxu0 0
    %584 = vmatprep.subr.bf16.mxu0 0
    %585 = vmatpush1.bf16.msra.mxu0 0
    %586 = vmatprep.subr.bf16.mxu0 0
    %587 = vmatpush1.bf16.msra.mxu0 0
    %588 = vmatprep.subr.bf16.mxu0 0
    %589 = vmatpush1.bf16.msra.mxu0 0
    %590 = vmatprep.subr.bf16.mxu0 0
    %591 = vmatpush1.bf16.msra.mxu0 0
    %592 = vmatprep.subr.bf16.mxu0 0
    %593 = vmatpush1.bf16.msra.mxu0 0
    %594 = vmatprep.subr.bf16.mxu0 0
    %595 = vmatpush1.bf16.msra.mxu0 0
    %596 = vmatprep.subr.bf16.mxu0 0
    %597 = vmatpush1.bf16.msra.mxu0 0
    %598 = vmatprep.subr.bf16.mxu0 0
    %599 = vmatpush1.bf16.msra.mxu0 0
    %600 = vmatprep.subr.bf16.mxu0 0
    %601 = vmatpush1.bf16.msra.mxu0 0
    %602 = vmatprep.subr.bf16.mxu0 0
    %603 = vmatpush1.bf16.msra.mxu0 0
    %604 = vmatprep.mubr.bf16.mxu0 0
    %605 = vmatmul.mubr.bf16.gmra.mrb[0].mxu0 %v570
    %v606 = vpop.f32.mrb[0].mxu0
    %v607 = vadd.f32 %v522, %v606
    %v608 = vpop.f32.mrb[0].mxu0
    %v609 = vadd.f32 %v526, %v608
    %v610 = vpop.f32.mrb[0].mxu0
    %v611 = vpop.f32.mrb[0].mxu0
    %612 = vdwg.mxu0
    %v615 = vcombine.low %v607, %v609
    %v616 = vcombine.high %v607, %v609
    %v618 = vunpack.c.l.s4 1966171168
    %v619 = vunpack.c.0.s8 %v618
    %v620 = vlaneseq
    %v621 = vshrl.u32 %v620, 7
    %v622 = vsub.s32 %v619, %v621
    %v623 = vrot.slane %v615, %v622
    %v625 = vunpack.c.l.s4 1966171168
    %v626 = vunpack.c.0.s8 %v625
    %v627 = vlaneseq
    %v628 = vshrl.u32 %v627, 7
    %v629 = vsub.s32 %v626, %v628
    %v630 = vrot.slane %v616, %v629
    %v631 = vcombine.high %v623, %v623
    %v632 = vcombine.high %v630, %v630
    %v634 = vunpack.c.l.s4 1966171168
    %v635 = vunpack.c.0.s8 %v634
    %v636 = vlaneseq
    %v637 = vshrl.u32 %v636, 7
    %v638 = vsub.s32 %v635, %v637
    %v639 = vrot.slane %v623, %v638
    %v641 = vunpack.c.l.s4 1966171168
    %v642 = vunpack.c.0.s8 %v641
    %v643 = vlaneseq
    %v644 = vshrl.u32 %v643, 7
    %v645 = vsub.s32 %v642, %v644
    %v646 = vrot.slane %v630, %v645
    %v648 = vunpack.c.l.s4 1966171168
    %v649 = vunpack.c.0.s8 %v648
    %v650 = vlaneseq
    %v651 = vshrl.u32 %v650, 7
    %v652 = vsub.s32 %v649, %v651
    %v653 = vrot.slane %v631, %v652
    %v655 = vunpack.c.l.s4 1966171168
    %v656 = vunpack.c.0.s8 %v655
    %v657 = vlaneseq
    %v658 = vshrl.u32 %v657, 7
    %v659 = vsub.s32 %v656, %v658
    %v660 = vrot.slane %v632, %v659
    %v661 = vcombine.high %v639, %v639
    %v662 = vcombine.high %v646, %v646
    %v663 = vcombine.high %v653, %v653
    %v664 = vcombine.high %v660, %v660
    %v673 = vlaneseq
    %vm674 = vcmp.ge.s32.totalorder %v673, 0
    %vm675 = vcmp.lt.s32.totalorder %v673, 256
    %vm676 = vmand %vm674, %vm675
    %677 = vst.msk [vmem:[%s11] ss:$8 sm:$0x3] %vm676, %v639
    %678 = vst.msk [vmem:[%s11] ss:$8 sm:$0x0] %vm676, %v639
    %s679 = scalar_lea.vmem %s11, 16
    %680 = vst.msk [vmem:[%s679] ss:$8 sm:$0x3] %vm676, %v653
    %681 = vst.msk [vmem:[%s679] ss:$8 sm:$0x0] %vm676, %v653
    %s682 = scalar_lea.vmem %s11, 32
    %683 = vst.msk [vmem:[%s682] ss:$8 sm:$0x3] %vm676, %v661
    %684 = vst.msk [vmem:[%s682] ss:$8 sm:$0x0] %vm676, %v661
    %s685 = scalar_lea.vmem %s11, 48
    %686 = vst.msk [vmem:[%s685] ss:$8 sm:$0x3] %vm676, %v663
    %687 = vst.msk [vmem:[%s685] ss:$8 sm:$0x0] %vm676, %v663
    %s688 = scalar_lea.vmem %s11, 64
    %689 = vst.msk [vmem:[%s688] ss:$8 sm:$0x3] %vm676, %v646
    %690 = vst.msk [vmem:[%s688] ss:$8 sm:$0x0] %vm676, %v646
    %s691 = scalar_lea.vmem %s11, 80
    %692 = vst.msk [vmem:[%s691] ss:$8 sm:$0x3] %vm676, %v660
    %693 = vst.msk [vmem:[%s691] ss:$8 sm:$0x0] %vm676, %v660
    %s694 = scalar_lea.vmem %s11, 96
    %695 = vst.msk [vmem:[%s694] ss:$8 sm:$0x3] %vm676, %v662
    %696 = vst.msk [vmem:[%s694] ss:$8 sm:$0x0] %vm676, %v662
    %s697 = scalar_lea.vmem %s11, 112
    %698 = vst.msk [vmem:[%s697] ss:$8 sm:$0x3] %vm676, %v664
    %699 = vst.msk [vmem:[%s697] ss:$8 sm:$0x0] %vm676, %v664
    %s700 = scalar_lea.vmem [#allocation6], 32
    %v701 = vld [vmem:[%s700] sm:$0xf]
    %v702 = vld [vmem:[%s700 + $0x4] sm:$0xf]
    %v703 = vld [vmem:[%s700 + $0x8] sm:$0xf]
    %v704 = vld [vmem:[%s700 + $0xc] sm:$0xf]
    %v705 = vld [vmem:[%s700 + $0x10] sm:$0xf]
    %v706 = vld [vmem:[%s700 + $0x14] sm:$0xf]
    %v707 = vld [vmem:[%s700 + $0x18] sm:$0xf]
    %v708 = vld [vmem:[%s700 + $0x1c] sm:$0xf]
    %v709 = vld [vmem:[%s8 + $0x1] sm:$0x1]
    %v710 = vlaneseq
    %v711 = vshrl.u32 %v710, 7
    %v712 = vsub.s32 0, %v711
    %v713 = vrot.slane %v709, %v712
    %715 = vrot.lane.b32.xlu0 %v425, 64
    %v716 = vpop.permute.xlu0 %715
    %v725 = vunpack.c.l.b16 %v701
    %v726 = vunpack.c.l.b16 %v702
    %v727 = vunpack.c.l.b16 %v703
    %v728 = vunpack.c.l.b16 %v704
    %v729 = vunpack.c.l.b16 %v705
    %v730 = vunpack.c.l.b16 %v706
    %v731 = vunpack.c.l.b16 %v707
    %v732 = vunpack.c.l.b16 %v708
    %v733 = vpack.c.b16 %v726, %v725
    %v734 = vpack.c.b16 %v728, %v727
    %v735 = vpack.c.b16 %v730, %v729
    %v736 = vpack.c.b16 %v732, %v731
    %v742 = vsel %vm463, %v716, 0
    %744 = vmatprep.subr.bf16.mxu0 0
    %745 = vmatpush1.bf16.msra.mxu0 %v733
    %746 = vmatprep.subr.bf16.mxu0 0
    %747 = vmatpush1.bf16.msra.mxu0 %v734
    %748 = vmatprep.subr.bf16.mxu0 0
    %749 = vmatpush1.bf16.msra.mxu0 %v735
    %750 = vmatprep.subr.bf16.mxu0 0
    %751 = vmatpush1.bf16.msra.mxu0 %v736
    %752 = vmatprep.subr.bf16.mxu0 0
    %753 = vmatpush1.bf16.msra.mxu0 0
    %754 = vmatprep.subr.bf16.mxu0 0
    %755 = vmatpush1.bf16.msra.mxu0 0
    %756 = vmatprep.subr.bf16.mxu0 0
    %757 = vmatpush1.bf16.msra.mxu0 0
    %758 = vmatprep.subr.bf16.mxu0 0
    %759 = vmatpush1.bf16.msra.mxu0 0
    %760 = vmatprep.subr.bf16.mxu0 0
    %761 = vmatpush1.bf16.msra.mxu0 0
    %762 = vmatprep.subr.bf16.mxu0 0
    %763 = vmatpush1.bf16.msra.mxu0 0
    %764 = vmatprep.subr.bf16.mxu0 0
    %765 = vmatpush1.bf16.msra.mxu0 0
    %766 = vmatprep.subr.bf16.mxu0 0
    %767 = vmatpush1.bf16.msra.mxu0 0
    %768 = vmatprep.subr.bf16.mxu0 0
    %769 = vmatpush1.bf16.msra.mxu0 0
    %770 = vmatprep.subr.bf16.mxu0 0
    %771 = vmatpush1.bf16.msra.mxu0 0
    %772 = vmatprep.subr.bf16.mxu0 0
    %773 = vmatpush1.bf16.msra.mxu0 0
    %774 = vmatprep.subr.bf16.mxu0 0
    %775 = vmatpush1.bf16.msra.mxu0 0
    %776 = vmatprep.mubr.bf16.mxu0 0
    %777 = vmatmul.mubr.bf16.gmra.mrb[0].mxu0 %v742
    %v778 = vpop.f32.mrb[0].mxu0
    %v779 = vadd.f32 %v713, %v778
    %v780 = vpop.f32.mrb[0].mxu0
    %v781 = vpop.f32.mrb[0].mxu0
    %v782 = vpop.f32.mrb[0].mxu0
    %783 = vdwg.mxu0
    %v784 = vmax.f32 %v779, 0.0
    %v785 = vpack.c.bf16 %v784, %v784
    %s786 = scalar_lea.vmem [#allocation7], 64
    %v787 = vld [vmem:[%s786] sm:$0xff]
    %v788 = vld [vmem:[%s786 + $0x8] sm:$0xff]
    %v789 = vld [vmem:[%s786 + $0x10] sm:$0xff]
    %v790 = vld [vmem:[%s786 + $0x18] sm:$0xff]
    %v791 = vld [vmem:[%s786 + $0x20] sm:$0xff]
    %v792 = vld [vmem:[%s786 + $0x28] sm:$0xff]
    %v793 = vld [vmem:[%s786 + $0x30] sm:$0xff]
    %v794 = vld [vmem:[%s786 + $0x38] sm:$0xff]
    %s795 = scalar_lea.vmem %s10, 1
    %v796 = vld [vmem:[%s795] ss:$8 sm:$0x3]
    %v798 = vlaneseq
    %v799 = vshrl.u32 %v798, 7
    %v800 = vsub.s32 0, %v799
    %v801 = vrot.slane %v796, %v800
    %v802 = vlaneseq
    %v803 = vshrl.u32 %v802, 7
    %v804 = vsub.s32 1, %v803
    %v805 = vrot.slane %v796, %v804
    %v816 = vunpack.c.l.b16 %v787
    %v817 = vunpack.c.h.b16 %v787
    %v818 = vunpack.c.l.b16 %v788
    %v819 = vunpack.c.h.b16 %v788
    %v820 = vunpack.c.l.b16 %v789
    %v821 = vunpack.c.h.b16 %v789
    %v822 = vunpack.c.l.b16 %v790
    %v823 = vunpack.c.h.b16 %v790
    %v824 = vunpack.c.l.b16 %v791
    %v825 = vunpack.c.h.b16 %v791
    %v826 = vunpack.c.l.b16 %v792
    %v827 = vunpack.c.h.b16 %v792
    %v828 = vunpack.c.l.b16 %v793
    %v829 = vunpack.c.h.b16 %v793
    %v830 = vunpack.c.l.b16 %v794
    %v831 = vunpack.c.h.b16 %v794
    %v832 = vpack.c.b16 %v818, %v816
    %v833 = vpack.c.b16 %v819, %v817
    %v834 = vpack.c.b16 %v822, %v820
    %v835 = vpack.c.b16 %v823, %v821
    %v836 = vpack.c.b16 %v826, %v824
    %v837 = vpack.c.b16 %v827, %v825
    %v838 = vpack.c.b16 %v830, %v828
    %v839 = vpack.c.b16 %v831, %v829
    %v849 = vsel %vm463, %v785, 0
    %851 = vmatprep.subr.bf16.mxu0 %v833
    %852 = vmatpush1.bf16.msra.mxu0 %v832
    %853 = vmatprep.subr.bf16.mxu0 %v835
    %854 = vmatpush1.bf16.msra.mxu0 %v834
    %855 = vmatprep.subr.bf16.mxu0 %v837
    %856 = vmatpush1.bf16.msra.mxu0 %v836
    %857 = vmatprep.subr.bf16.mxu0 %v839
    %858 = vmatpush1.bf16.msra.mxu0 %v838
    %859 = vmatprep.subr.bf16.mxu0 0
    %860 = vmatpush1.bf16.msra.mxu0 0
    %861 = vmatprep.subr.bf16.mxu0 0
    %862 = vmatpush1.bf16.msra.mxu0 0
    %863 = vmatprep.subr.bf16.mxu0 0
    %864 = vmatpush1.bf16.msra.mxu0 0
    %865 = vmatprep.subr.bf16.mxu0 0
    %866 = vmatpush1.bf16.msra.mxu0 0
    %867 = vmatprep.subr.bf16.mxu0 0
    %868 = vmatpush1.bf16.msra.mxu0 0
    %869 = vmatprep.subr.bf16.mxu0 0
    %870 = vmatpush1.bf16.msra.mxu0 0
    %871 = vmatprep.subr.bf16.mxu0 0
    %872 = vmatpush1.bf16.msra.mxu0 0
    %873 = vmatprep.subr.bf16.mxu0 0
    %874 = vmatpush1.bf16.msra.mxu0 0
    %875 = vmatprep.subr.bf16.mxu0 0
    %876 = vmatpush1.bf16.msra.mxu0 0
    %877 = vmatprep.subr.bf16.mxu0 0
    %878 = vmatpush1.bf16.msra.mxu0 0
    %879 = vmatprep.subr.bf16.mxu0 0
    %880 = vmatpush1.bf16.msra.mxu0 0
    %881 = vmatprep.subr.bf16.mxu0 0
    %882 = vmatpush1.bf16.msra.mxu0 0
    %883 = vmatprep.mubr.bf16.mxu0 0
    %884 = vmatmul.mubr.bf16.gmra.mrb[0].mxu0 %v849
    %v885 = vpop.f32.mrb[0].mxu0
    %v886 = vadd.f32 %v801, %v885
    %v887 = vpop.f32.mrb[0].mxu0
    %v888 = vadd.f32 %v805, %v887
    %v889 = vpop.f32.mrb[0].mxu0
    %v890 = vpop.f32.mrb[0].mxu0
    %891 = vdwg.mxu0
    %v894 = vcombine.low %v886, %v888
    %v895 = vcombine.high %v886, %v888
    %v897 = vunpack.c.l.s4 1966171168
    %v898 = vunpack.c.0.s8 %v897
    %v899 = vlaneseq
    %v900 = vshrl.u32 %v899, 7
    %v901 = vsub.s32 %v898, %v900
    %v902 = vrot.slane %v894, %v901
    %v904 = vunpack.c.l.s4 1966171168
    %v905 = vunpack.c.0.s8 %v904
    %v906 = vlaneseq
    %v907 = vshrl.u32 %v906, 7
    %v908 = vsub.s32 %v905, %v907
    %v909 = vrot.slane %v895, %v908
    %v910 = vcombine.high %v902, %v902
    %v911 = vcombine.high %v909, %v909
    %v913 = vunpack.c.l.s4 1966171168
    %v914 = vunpack.c.0.s8 %v913
    %v915 = vlaneseq
    %v916 = vshrl.u32 %v915, 7
    %v917 = vsub.s32 %v914, %v916
    %v918 = vrot.slane %v902, %v917
    %v920 = vunpack.c.l.s4 1966171168
    %v921 = vunpack.c.0.s8 %v920
    %v922 = vlaneseq
    %v923 = vshrl.u32 %v922, 7
    %v924 = vsub.s32 %v921, %v923
    %v925 = vrot.slane %v909, %v924
    %v927 = vunpack.c.l.s4 1966171168
    %v928 = vunpack.c.0.s8 %v927
    %v929 = vlaneseq
    %v930 = vshrl.u32 %v929, 7
    %v931 = vsub.s32 %v928, %v930
    %v932 = vrot.slane %v910, %v931
    %v934 = vunpack.c.l.s4 1966171168
    %v935 = vunpack.c.0.s8 %v934
    %v936 = vlaneseq
    %v937 = vshrl.u32 %v936, 7
    %v938 = vsub.s32 %v935, %v937
    %v939 = vrot.slane %v911, %v938
    %v940 = vcombine.high %v918, %v918
    %v941 = vcombine.high %v925, %v925
    %v942 = vcombine.high %v932, %v932
    %v943 = vcombine.high %v939, %v939
    %s952 = scalar_lea.vmem %s11, 1
    %953 = vst.msk [vmem:[%s952] ss:$8 sm:$0x3] %vm676, %v918
    %954 = vst.msk [vmem:[%s952] ss:$8 sm:$0x0] %vm676, %v918
    %s955 = scalar_lea.vmem %s11, 17
    %956 = vst.msk [vmem:[%s955] ss:$8 sm:$0x3] %vm676, %v932
    %957 = vst.msk [vmem:[%s955] ss:$8 sm:$0x0] %vm676, %v932
    %s958 = scalar_lea.vmem %s11, 33
    %959 = vst.msk [vmem:[%s958] ss:$8 sm:$0x3] %vm676, %v940
    %960 = vst.msk [vmem:[%s958] ss:$8 sm:$0x0] %vm676, %v940
    %s961 = scalar_lea.vmem %s11, 49
    %962 = vst.msk [vmem:[%s961] ss:$8 sm:$0x3] %vm676, %v942
    %963 = vst.msk [vmem:[%s961] ss:$8 sm:$0x0] %vm676, %v942
    %s964 = scalar_lea.vmem %s11, 65
    %965 = vst.msk [vmem:[%s964] ss:$8 sm:$0x3] %vm676, %v925
    %966 = vst.msk [vmem:[%s964] ss:$8 sm:$0x0] %vm676, %v925
    %s967 = scalar_lea.vmem %s11, 81
    %968 = vst.msk [vmem:[%s967] ss:$8 sm:$0x3] %vm676, %v939
    %969 = vst.msk [vmem:[%s967] ss:$8 sm:$0x0] %vm676, %v939
    %s970 = scalar_lea.vmem %s11, 97
    %971 = vst.msk [vmem:[%s970] ss:$8 sm:$0x3] %vm676, %v941
    %972 = vst.msk [vmem:[%s970] ss:$8 sm:$0x0] %vm676, %v941
    %s973 = scalar_lea.vmem %s11, 113
    %974 = vst.msk [vmem:[%s973] ss:$8 sm:$0x3] %vm676, %v943
    %975 = vst.msk [vmem:[%s973] ss:$8 sm:$0x0] %vm676, %v943
    %v976 = vpack.c.bf16 %v422, %v422
    %s977 = scalar_lea.vmem [#allocation6], 64
    %v978 = vld [vmem:[%s977] sm:$0xf]
    %v979 = vld [vmem:[%s977 + $0x4] sm:$0xf]
    %v980 = vld [vmem:[%s977 + $0x8] sm:$0xf]
    %v981 = vld [vmem:[%s977 + $0xc] sm:$0xf]
    %v982 = vld [vmem:[%s977 + $0x10] sm:$0xf]
    %v983 = vld [vmem:[%s977 + $0x14] sm:$0xf]
    %v984 = vld [vmem:[%s977 + $0x18] sm:$0xf]
    %v985 = vld [vmem:[%s977 + $0x1c] sm:$0xf]
    %v986 = vld [vmem:[%s8 + $0x2] sm:$0x1]
    %v987 = vlaneseq
    %v988 = vshrl.u32 %v987, 7
    %v989 = vsub.s32 0, %v988
    %v990 = vrot.slane %v986, %v989
    %v999 = vunpack.c.l.b16 %v978
    %v1000 = vunpack.c.l.b16 %v979
    %v1001 = vunpack.c.l.b16 %v980
    %v1002 = vunpack.c.l.b16 %v981
    %v1003 = vunpack.c.l.b16 %v982
    %v1004 = vunpack.c.l.b16 %v983
    %v1005 = vunpack.c.l.b16 %v984
    %v1006 = vunpack.c.l.b16 %v985
    %v1007 = vpack.c.b16 %v1000, %v999
    %v1008 = vpack.c.b16 %v1002, %v1001
    %v1009 = vpack.c.b16 %v1004, %v1003
    %v1010 = vpack.c.b16 %v1006, %v1005
    %v1016 = vsel %vm463, %v976, 0
    %1018 = vmatprep.subr.bf16.mxu0 0
    %1019 = vmatpush1.bf16.msra.mxu0 %v1007
    %1020 = vmatprep.subr.bf16.mxu0 0
    %1021 = vmatpush1.bf16.msra.mxu0 %v1008
    %1022 = vmatprep.subr.bf16.mxu0 0
    %1023 = vmatpush1.bf16.msra.mxu0 %v1009
    %1024 = vmatprep.subr.bf16.mxu0 0
    %1025 = vmatpush1.bf16.msra.mxu0 %v1010
    %1026 = vmatprep.subr.bf16.mxu0 0
    %1027 = vmatpush1.bf16.msra.mxu0 0
    %1028 = vmatprep.subr.bf16.mxu0 0
    %1029 = vmatpush1.bf16.msra.mxu0 0
    %1030 = vmatprep.subr.bf16.mxu0 0
    %1031 = vmatpush1.bf16.msra.mxu0 0
    %1032 = vmatprep.subr.bf16.mxu0 0
    %1033 = vmatpush1.bf16.msra.mxu0 0
    %1034 = vmatprep.subr.bf16.mxu0 0
    %1035 = vmatpush1.bf16.msra.mxu0 0
    %1036 = vmatprep.subr.bf16.mxu0 0
    %1037 = vmatpush1.bf16.msra.mxu0 0
    %1038 = vmatprep.subr.bf16.mxu0 0
    %1039 = vmatpush1.bf16.msra.mxu0 0
    %1040 = vmatprep.subr.bf16.mxu0 0
    %1041 = vmatpush1.bf16.msra.mxu0 0
    %1042 = vmatprep.subr.bf16.mxu0 0
    %1043 = vmatpush1.bf16.msra.mxu0 0
    %1044 = vmatprep.subr.bf16.mxu0 0
    %1045 = vmatpush1.bf16.msra.mxu0 0
    %1046 = vmatprep.subr.bf16.mxu0 0
    %1047 = vmatpush1.bf16.msra.mxu0 0
    %1048 = vmatprep.subr.bf16.mxu0 0
    %1049 = vmatpush1.bf16.msra.mxu0 0
    %1050 = vmatprep.mubr.bf16.mxu0 0
    %1051 = vmatmul.mubr.bf16.gmra.mrb[0].mxu0 %v1016
    %v1052 = vpop.f32.mrb[0].mxu0
    %v1053 = vadd.f32 %v990, %v1052
    %v1054 = vpop.f32.mrb[0].mxu0
    %v1055 = vpop.f32.mrb[0].mxu0
    %v1056 = vpop.f32.mrb[0].mxu0
    %1057 = vdwg.mxu0
    %v1058 = vmax.f32 %v1053, 0.0
    %v1059 = vpack.c.bf16 %v1058, %v1058
    %s1060 = scalar_lea.vmem [#allocation7], 128
    %v1061 = vld [vmem:[%s1060] sm:$0xff]
    %v1062 = vld [vmem:[%s1060 + $0x8] sm:$0xff]
    %v1063 = vld [vmem:[%s1060 + $0x10] sm:$0xff]
    %v1064 = vld [vmem:[%s1060 + $0x18] sm:$0xff]
    %v1065 = vld [vmem:[%s1060 + $0x20] sm:$0xff]
    %v1066 = vld [vmem:[%s1060 + $0x28] sm:$0xff]
    %v1067 = vld [vmem:[%s1060 + $0x30] sm:$0xff]
    %v1068 = vld [vmem:[%s1060 + $0x38] sm:$0xff]
    %s1069 = scalar_lea.vmem %s10, 2
    %v1070 = vld [vmem:[%s1069] ss:$8 sm:$0x3]
    %v1072 = vlaneseq
    %v1073 = vshrl.u32 %v1072, 7
    %v1074 = vsub.s32 0, %v1073
    %v1075 = vrot.slane %v1070, %v1074
    %v1076 = vlaneseq
    %v1077 = vshrl.u32 %v1076, 7
    %v1078 = vsub.s32 1, %v1077
    %v1079 = vrot.slane %v1070, %v1078
    %v1090 = vunpack.c.l.b16 %v1061
    %v1091 = vunpack.c.h.b16 %v1061
    %v1092 = vunpack.c.l.b16 %v1062
    %v1093 = vunpack.c.h.b16 %v1062
    %v1094 = vunpack.c.l.b16 %v1063
    %v1095 = vunpack.c.h.b16 %v1063
    %v1096 = vunpack.c.l.b16 %v1064
    %v1097 = vunpack.c.h.b16 %v1064
    %v1098 = vunpack.c.l.b16 %v1065
    %v1099 = vunpack.c.h.b16 %v1065
    %v1100 = vunpack.c.l.b16 %v1066
    %v1101 = vunpack.c.h.b16 %v1066
    %v1102 = vunpack.c.l.b16 %v1067
    %v1103 = vunpack.c.h.b16 %v1067
    %v1104 = vunpack.c.l.b16 %v1068
    %v1105 = vunpack.c.h.b16 %v1068
    %v1106 = vpack.c.b16 %v1092, %v1090
    %v1107 = vpack.c.b16 %v1093, %v1091
    %v1108 = vpack.c.b16 %v1096, %v1094
    %v1109 = vpack.c.b16 %v1097, %v1095
    %v1110 = vpack.c.b16 %v1100, %v1098
    %v1111 = vpack.c.b16 %v1101, %v1099
    %v1112 = vpack.c.b16 %v1104, %v1102
    %v1113 = vpack.c.b16 %v1105, %v1103
    %v1123 = vsel %vm463, %v1059, 0
    %1125 = vmatprep.subr.bf16.mxu0 %v1107
    %1126 = vmatpush1.bf16.msra.mxu0 %v1106
    %1127 = vmatprep.subr.bf16.mxu0 %v1109
    %1128 = vmatpush1.bf16.msra.mxu0 %v1108
    %1129 = vmatprep.subr.bf16.mxu0 %v1111
    %1130 = vmatpush1.bf16.msra.mxu0 %v1110
    %1131 = vmatprep.subr.bf16.mxu0 %v1113
    %1132 = vmatpush1.bf16.msra.mxu0 %v1112
    %1133 = vmatprep.subr.bf16.mxu0 0
    %1134 = vmatpush1.bf16.msra.mxu0 0
    %1135 = vmatprep.subr.bf16.mxu0 0
    %1136 = vmatpush1.bf16.msra.mxu0 0
    %1137 = vmatprep.subr.bf16.mxu0 0
    %1138 = vmatpush1.bf16.msra.mxu0 0
    %1139 = vmatprep.subr.bf16.mxu0 0
    %1140 = vmatpush1.bf16.msra.mxu0 0
    %1141 = vmatprep.subr.bf16.mxu0 0
    %1142 = vmatpush1.bf16.msra.mxu0 0
    %1143 = vmatprep.subr.bf16.mxu0 0
    %1144 = vmatpush1.bf16.msra.mxu0 0
    %1145 = vmatprep.subr.bf16.mxu0 0
    %1146 = vmatpush1.bf16.msra.mxu0 0
    %1147 = vmatprep.subr.bf16.mxu0 0
    %1148 = vmatpush1.bf16.msra.mxu0 0
    %1149 = vmatprep.subr.bf16.mxu0 0
    %1150 = vmatpush1.bf16.msra.mxu0 0
    %1151 = vmatprep.subr.bf16.mxu0 0
    %1152 = vmatpush1.bf16.msra.mxu0 0
    %1153 = vmatprep.subr.bf16.mxu0 0
    %1154 = vmatpush1.bf16.msra.mxu0 0
    %1155 = vmatprep.subr.bf16.mxu0 0
    %1156 = vmatpush1.bf16.msra.mxu0 0
    %1157 = vmatprep.mubr.bf16.mxu0 0
    %1158 = vmatmul.mubr.bf16.gmra.mrb[0].mxu0 %v1123
    %v1159 = vpop.f32.mrb[0].mxu0
    %v1160 = vadd.f32 %v1075, %v1159
    %v1161 = vpop.f32.mrb[0].mxu0
    %v1162 = vadd.f32 %v1079, %v1161
    %v1163 = vpop.f32.mrb[0].mxu0
    %v1164 = vpop.f32.mrb[0].mxu0
    %1165 = vdwg.mxu0
    %v1168 = vcombine.low %v1160, %v1162
    %v1169 = vcombine.high %v1160, %v1162
    %v1171 = vunpack.c.l.s4 1966171168
    %v1172 = vunpack.c.0.s8 %v1171
    %v1173 = vlaneseq
    %v1174 = vshrl.u32 %v1173, 7
    %v1175 = vsub.s32 %v1172, %v1174
    %v1176 = vrot.slane %v1168, %v1175
    %v1178 = vunpack.c.l.s4 1966171168
    %v1179 = vunpack.c.0.s8 %v1178
    %v1180 = vlaneseq
    %v1181 = vshrl.u32 %v1180, 7
    %v1182 = vsub.s32 %v1179, %v1181
    %v1183 = vrot.slane %v1169, %v1182
    %v1184 = vcombine.high %v1176, %v1176
    %v1185 = vcombine.high %v1183, %v1183
    %v1187 = vunpack.c.l.s4 1966171168
    %v1188 = vunpack.c.0.s8 %v1187
    %v1189 = vlaneseq
    %v1190 = vshrl.u32 %v1189, 7
    %v1191 = vsub.s32 %v1188, %v1190
    %v1192 = vrot.slane %v1176, %v1191
    %v1194 = vunpack.c.l.s4 1966171168
    %v1195 = vunpack.c.0.s8 %v1194
    %v1196 = vlaneseq
    %v1197 = vshrl.u32 %v1196, 7
    %v1198 = vsub.s32 %v1195, %v1197
    %v1199 = vrot.slane %v1183, %v1198
    %v1201 = vunpack.c.l.s4 1966171168
    %v1202 = vunpack.c.0.s8 %v1201
    %v1203 = vlaneseq
    %v1204 = vshrl.u32 %v1203, 7
    %v1205 = vsub.s32 %v1202, %v1204
    %v1206 = vrot.slane %v1184, %v1205
    %v1208 = vunpack.c.l.s4 1966171168
    %v1209 = vunpack.c.0.s8 %v1208
    %v1210 = vlaneseq
    %v1211 = vshrl.u32 %v1210, 7
    %v1212 = vsub.s32 %v1209, %v1211
    %v1213 = vrot.slane %v1185, %v1212
    %v1214 = vcombine.high %v1192, %v1192
    %v1215 = vcombine.high %v1199, %v1199
    %v1216 = vcombine.high %v1206, %v1206
    %v1217 = vcombine.high %v1213, %v1213
    %s1226 = scalar_lea.vmem %s11, 2
    %1227 = vst.msk [vmem:[%s1226] ss:$8 sm:$0x3] %vm676, %v1192
    %1228 = vst.msk [vmem:[%s1226] ss:$8 sm:$0x0] %vm676, %v1192
    %s1229 = scalar_lea.vmem %s11, 18
    %1230 = vst.msk [vmem:[%s1229] ss:$8 sm:$0x3] %vm676, %v1206
    %1231 = vst.msk [vmem:[%s1229] ss:$8 sm:$0x0] %vm676, %v1206
    %s1232 = scalar_lea.vmem %s11, 34
    %1233 = vst.msk [vmem:[%s1232] ss:$8 sm:$0x3] %vm676, %v1214
    %1234 = vst.msk [vmem:[%s1232] ss:$8 sm:$0x0] %vm676, %v1214
    %s1235 = scalar_lea.vmem %s11, 50
    %1236 = vst.msk [vmem:[%s1235] ss:$8 sm:$0x3] %vm676, %v1216
    %1237 = vst.msk [vmem:[%s1235] ss:$8 sm:$0x0] %vm676, %v1216
    %s1238 = scalar_lea.vmem %s11, 66
    %1239 = vst.msk [vmem:[%s1238] ss:$8 sm:$0x3] %vm676, %v1199
    %1240 = vst.msk [vmem:[%s1238] ss:$8 sm:$0x0] %vm676, %v1199
    %s1241 = scalar_lea.vmem %s11, 82
    %1242 = vst.msk [vmem:[%s1241] ss:$8 sm:$0x3] %vm676, %v1213
    %1243 = vst.msk [vmem:[%s1241] ss:$8 sm:$0x0] %vm676, %v1213
    %s1244 = scalar_lea.vmem %s11, 98
    %1245 = vst.msk [vmem:[%s1244] ss:$8 sm:$0x3] %vm676, %v1215
    %1246 = vst.msk [vmem:[%s1244] ss:$8 sm:$0x0] %vm676, %v1215
    %s1247 = scalar_lea.vmem %s11, 114
    %1248 = vst.msk [vmem:[%s1247] ss:$8 sm:$0x3] %vm676, %v1217
    %1249 = vst.msk [vmem:[%s1247] ss:$8 sm:$0x0] %vm676, %v1217
    %s1250 = scalar_lea.vmem [#allocation6], 96
    %v1251 = vld [vmem:[%s1250] sm:$0xf]
    %v1252 = vld [vmem:[%s1250 + $0x4] sm:$0xf]
    %v1253 = vld [vmem:[%s1250 + $0x8] sm:$0xf]
    %v1254 = vld [vmem:[%s1250 + $0xc] sm:$0xf]
    %v1255 = vld [vmem:[%s1250 + $0x10] sm:$0xf]
    %v1256 = vld [vmem:[%s1250 + $0x14] sm:$0xf]
    %v1257 = vld [vmem:[%s1250 + $0x18] sm:$0xf]
    %v1258 = vld [vmem:[%s1250 + $0x1c] sm:$0xf]
    %v1259 = vld [vmem:[%s8 + $0x3] sm:$0x1]
    %v1260 = vlaneseq
    %v1261 = vshrl.u32 %v1260, 7
    %v1262 = vsub.s32 0, %v1261
    %v1263 = vrot.slane %v1259, %v1262
    %1265 = vrot.lane.b32.xlu0 %v976, 64
    %v1266 = vpop.permute.xlu0 %1265
    %v1275 = vunpack.c.l.b16 %v1251
    %v1276 = vunpack.c.l.b16 %v1252
    %v1277 = vunpack.c.l.b16 %v1253
    %v1278 = vunpack.c.l.b16 %v1254
    %v1279 = vunpack.c.l.b16 %v1255
    %v1280 = vunpack.c.l.b16 %v1256
    %v1281 = vunpack.c.l.b16 %v1257
    %v1282 = vunpack.c.l.b16 %v1258
    %v1283 = vpack.c.b16 %v1276, %v1275
    %v1284 = vpack.c.b16 %v1278, %v1277
    %v1285 = vpack.c.b16 %v1280, %v1279
    %v1286 = vpack.c.b16 %v1282, %v1281
    %v1292 = vsel %vm463, %v1266, 0
    %1294 = vmatprep.subr.bf16.mxu0 0
    %1295 = vmatpush1.bf16.msra.mxu0 %v1283
    %1296 = vmatprep.subr.bf16.mxu0 0
    %1297 = vmatpush1.bf16.msra.mxu0 %v1284
    %1298 = vmatprep.subr.bf16.mxu0 0
    %1299 = vmatpush1.bf16.msra.mxu0 %v1285
    %1300 = vmatprep.subr.bf16.mxu0 0
    %1301 = vmatpush1.bf16.msra.mxu0 %v1286
    %1302 = vmatprep.subr.bf16.mxu0 0
    %1303 = vmatpush1.bf16.msra.mxu0 0
    %1304 = vmatprep.subr.bf16.mxu0 0
    %1305 = vmatpush1.bf16.msra.mxu0 0
    %1306 = vmatprep.subr.bf16.mxu0 0
    %1307 = vmatpush1.bf16.msra.mxu0 0
    %1308 = vmatprep.subr.bf16.mxu0 0
    %1309 = vmatpush1.bf16.msra.mxu0 0
    %1310 = vmatprep.subr.bf16.mxu0 0
    %1311 = vmatpush1.bf16.msra.mxu0 0
    %1312 = vmatprep.subr.bf16.mxu0 0
    %1313 = vmatpush1.bf16.msra.mxu0 0
    %1314 = vmatprep.subr.bf16.mxu0 0
    %1315 = vmatpush1.bf16.msra.mxu0 0
    %1316 = vmatprep.subr.bf16.mxu0 0
    %1317 = vmatpush1.bf16.msra.mxu0 0
    %1318 = vmatprep.subr.bf16.mxu0 0
    %1319 = vmatpush1.bf16.msra.mxu0 0
    %1320 = vmatprep.subr.bf16.mxu0 0
    %1321 = vmatpush1.bf16.msra.mxu0 0
    %1322 = vmatprep.subr.bf16.mxu0 0
    %1323 = vmatpush1.bf16.msra.mxu0 0
    %1324 = vmatprep.subr.bf16.mxu0 0
    %1325 = vmatpush1.bf16.msra.mxu0 0
    %1326 = vmatprep.mubr.bf16.mxu0 0
    %1327 = vmatmul.mubr.bf16.gmra.mrb[0].mxu0 %v1292
    %v1328 = vpop.f32.mrb[0].mxu0
    %v1329 = vadd.f32 %v1263, %v1328
    %v1330 = vpop.f32.mrb[0].mxu0
    %v1331 = vpop.f32.mrb[0].mxu0
    %v1332 = vpop.f32.mrb[0].mxu0
    %1333 = vdwg.mxu0
    %v1334 = vmax.f32 %v1329, 0.0
    %v1335 = vpack.c.bf16 %v1334, %v1334
    %s1336 = scalar_lea.vmem [#allocation7], 192
    %v1337 = vld [vmem:[%s1336] sm:$0xff]
    %v1338 = vld [vmem:[%s1336 + $0x8] sm:$0xff]
    %v1339 = vld [vmem:[%s1336 + $0x10] sm:$0xff]
    %v1340 = vld [vmem:[%s1336 + $0x18] sm:$0xff]
    %v1341 = vld [vmem:[%s1336 + $0x20] sm:$0xff]
    %v1342 = vld [vmem:[%s1336 + $0x28] sm:$0xff]
    %v1343 = vld [vmem:[%s1336 + $0x30] sm:$0xff]
    %v1344 = vld [vmem:[%s1336 + $0x38] sm:$0xff]
    %s1345 = scalar_lea.vmem %s10, 3
    %v1346 = vld [vmem:[%s1345] ss:$8 sm:$0x3]
    %v1348 = vlaneseq
    %v1349 = vshrl.u32 %v1348, 7
    %v1350 = vsub.s32 0, %v1349
    %v1351 = vrot.slane %v1346, %v1350
    %v1352 = vlaneseq
    %v1353 = vshrl.u32 %v1352, 7
    %v1354 = vsub.s32 1, %v1353
    %v1355 = vrot.slane %v1346, %v1354
    %v1366 = vunpack.c.l.b16 %v1337
    %v1367 = vunpack.c.h.b16 %v1337
    %v1368 = vunpack.c.l.b16 %v1338
    %v1369 = vunpack.c.h.b16 %v1338
    %v1370 = vunpack.c.l.b16 %v1339
    %v1371 = vunpack.c.h.b16 %v1339
    %v1372 = vunpack.c.l.b16 %v1340
    %v1373 = vunpack.c.h.b16 %v1340
    %v1374 = vunpack.c.l.b16 %v1341
    %v1375 = vunpack.c.h.b16 %v1341
    %v1376 = vunpack.c.l.b16 %v1342
    %v1377 = vunpack.c.h.b16 %v1342
    %v1378 = vunpack.c.l.b16 %v1343
    %v1379 = vunpack.c.h.b16 %v1343
    %v1380 = vunpack.c.l.b16 %v1344
    %v1381 = vunpack.c.h.b16 %v1344
    %v1382 = vpack.c.b16 %v1368, %v1366
    %v1383 = vpack.c.b16 %v1369, %v1367
    %v1384 = vpack.c.b16 %v1372, %v1370
    %v1385 = vpack.c.b16 %v1373, %v1371
    %v1386 = vpack.c.b16 %v1376, %v1374
    %v1387 = vpack.c.b16 %v1377, %v1375
    %v1388 = vpack.c.b16 %v1380, %v1378
    %v1389 = vpack.c.b16 %v1381, %v1379
    %v1399 = vsel %vm463, %v1335, 0
    %1401 = vmatprep.subr.bf16.mxu0 %v1383
    %1402 = vmatpush1.bf16.msra.mxu0 %v1382
    %1403 = vmatprep.subr.bf16.mxu0 %v1385
    %1404 = vmatpush1.bf16.msra.mxu0 %v1384
    %1405 = vmatprep.subr.bf16.mxu0 %v1387
    %1406 = vmatpush1.bf16.msra.mxu0 %v1386
    %1407 = vmatprep.subr.bf16.mxu0 %v1389
    %1408 = vmatpush1.bf16.msra.mxu0 %v1388
    %1409 = vmatprep.subr.bf16.mxu0 0
    %1410 = vmatpush1.bf16.msra.mxu0 0
    %1411 = vmatprep.subr.bf16.mxu0 0
    %1412 = vmatpush1.bf16.msra.mxu0 0
    %1413 = vmatprep.subr.bf16.mxu0 0
    %1414 = vmatpush1.bf16.msra.mxu0 0
    %1415 = vmatprep.subr.bf16.mxu0 0
    %1416 = vmatpush1.bf16.msra.mxu0 0
    %1417 = vmatprep.subr.bf16.mxu0 0
    %1418 = vmatpush1.bf16.msra.mxu0 0
    %1419 = vmatprep.subr.bf16.mxu0 0
    %1420 = vmatpush1.bf16.msra.mxu0 0
    %1421 = vmatprep.subr.bf16.mxu0 0
    %1422 = vmatpush1.bf16.msra.mxu0 0
    %1423 = vmatprep.subr.bf16.mxu0 0
    %1424 = vmatpush1.bf16.msra.mxu0 0
    %1425 = vmatprep.subr.bf16.mxu0 0
    %1426 = vmatpush1.bf16.msra.mxu0 0
    %1427 = vmatprep.subr.bf16.mxu0 0
    %1428 = vmatpush1.bf16.msra.mxu0 0
    %1429 = vmatprep.subr.bf16.mxu0 0
    %1430 = vmatpush1.bf16.msra.mxu0 0
    %1431 = vmatprep.subr.bf16.mxu0 0
    %1432 = vmatpush1.bf16.msra.mxu0 0
    %1433 = vmatprep.mubr.bf16.mxu0 0
    %1434 = vmatmul.mubr.bf16.gmra.mrb[0].mxu0 %v1399
    %v1435 = vpop.f32.mrb[0].mxu0
    %v1436 = vadd.f32 %v1351, %v1435
    %v1437 = vpop.f32.mrb[0].mxu0
    %v1438 = vadd.f32 %v1355, %v1437
    %v1439 = vpop.f32.mrb[0].mxu0
    %v1440 = vpop.f32.mrb[0].mxu0
    %1441 = vdwg.mxu0
    %v1444 = vcombine.low %v1436, %v1438
    %v1445 = vcombine.high %v1436, %v1438
    %v1447 = vunpack.c.l.s4 1966171168
    %v1448 = vunpack.c.0.s8 %v1447
    %v1449 = vlaneseq
    %v1450 = vshrl.u32 %v1449, 7
    %v1451 = vsub.s32 %v1448, %v1450
    %v1452 = vrot.slane %v1444, %v1451
    %v1454 = vunpack.c.l.s4 1966171168
    %v1455 = vunpack.c.0.s8 %v1454
    %v1456 = vlaneseq
    %v1457 = vshrl.u32 %v1456, 7
    %v1458 = vsub.s32 %v1455, %v1457
    %v1459 = vrot.slane %v1445, %v1458
    %v1460 = vcombine.high %v1452, %v1452
    %v1461 = vcombine.high %v1459, %v1459
    %v1463 = vunpack.c.l.s4 1966171168
    %v1464 = vunpack.c.0.s8 %v1463
    %v1465 = vlaneseq
    %v1466 = vshrl.u32 %v1465, 7
    %v1467 = vsub.s32 %v1464, %v1466
    %v1468 = vrot.slane %v1452, %v1467
    %v1470 = vunpack.c.l.s4 1966171168
    %v1471 = vunpack.c.0.s8 %v1470
    %v1472 = vlaneseq
    %v1473 = vshrl.u32 %v1472, 7
    %v1474 = vsub.s32 %v1471, %v1473
    %v1475 = vrot.slane %v1459, %v1474
    %v1477 = vunpack.c.l.s4 1966171168
    %v1478 = vunpack.c.0.s8 %v1477
    %v1479 = vlaneseq
    %v1480 = vshrl.u32 %v1479, 7
    %v1481 = vsub.s32 %v1478, %v1480
    %v1482 = vrot.slane %v1460, %v1481
    %v1484 = vunpack.c.l.s4 1966171168
    %v1485 = vunpack.c.0.s8 %v1484
    %v1486 = vlaneseq
    %v1487 = vshrl.u32 %v1486, 7
    %v1488 = vsub.s32 %v1485, %v1487
    %v1489 = vrot.slane %v1461, %v1488
    %v1490 = vcombine.high %v1468, %v1468
    %v1491 = vcombine.high %v1475, %v1475
    %v1492 = vcombine.high %v1482, %v1482
    %v1493 = vcombine.high %v1489, %v1489
    %s1502 = scalar_lea.vmem %s11, 3
    %1503 = vst.msk [vmem:[%s1502] ss:$8 sm:$0x3] %vm676, %v1468
    %1504 = vst.msk [vmem:[%s1502] ss:$8 sm:$0x0] %vm676, %v1468
    %s1505 = scalar_lea.vmem %s11, 19
    %1506 = vst.msk [vmem:[%s1505] ss:$8 sm:$0x3] %vm676, %v1482
    %1507 = vst.msk [vmem:[%s1505] ss:$8 sm:$0x0] %vm676, %v1482
    %s1508 = scalar_lea.vmem %s11, 35
    %1509 = vst.msk [vmem:[%s1508] ss:$8 sm:$0x3] %vm676, %v1490
    %1510 = vst.msk [vmem:[%s1508] ss:$8 sm:$0x0] %vm676, %v1490
    %s1511 = scalar_lea.vmem %s11, 51
    %1512 = vst.msk [vmem:[%s1511] ss:$8 sm:$0x3] %vm676, %v1492
    %1513 = vst.msk [vmem:[%s1511] ss:$8 sm:$0x0] %vm676, %v1492
    %s1514 = scalar_lea.vmem %s11, 67
    %1515 = vst.msk [vmem:[%s1514] ss:$8 sm:$0x3] %vm676, %v1475
    %1516 = vst.msk [vmem:[%s1514] ss:$8 sm:$0x0] %vm676, %v1475
    %s1517 = scalar_lea.vmem %s11, 83
    %1518 = vst.msk [vmem:[%s1517] ss:$8 sm:$0x3] %vm676, %v1489
    %1519 = vst.msk [vmem:[%s1517] ss:$8 sm:$0x0] %vm676, %v1489
    %s1520 = scalar_lea.vmem %s11, 99
    %1521 = vst.msk [vmem:[%s1520] ss:$8 sm:$0x3] %vm676, %v1491
    %1522 = vst.msk [vmem:[%s1520] ss:$8 sm:$0x0] %vm676, %v1491
    %s1523 = scalar_lea.vmem %s11, 115
    %1524 = vst.msk [vmem:[%s1523] ss:$8 sm:$0x3] %vm676, %v1493
    %1525 = vst.msk [vmem:[%s1523] ss:$8 sm:$0x0] %vm676, %v1493
    %v1526 = vpack.c.bf16 %v423, %v423
    %s1527 = scalar_lea.vmem [#allocation6], 128
    %v1528 = vld [vmem:[%s1527] sm:$0xf]
    %v1529 = vld [vmem:[%s1527 + $0x4] sm:$0xf]
    %v1530 = vld [vmem:[%s1527 + $0x8] sm:$0xf]
    %v1531 = vld [vmem:[%s1527 + $0xc] sm:$0xf]
    %v1532 = vld [vmem:[%s1527 + $0x10] sm:$0xf]
    %v1533 = vld [vmem:[%s1527 + $0x14] sm:$0xf]
    %v1534 = vld [vmem:[%s1527 + $0x18] sm:$0xf]
    %v1535 = vld [vmem:[%s1527 + $0x1c] sm:$0xf]
    %v1536 = vld [vmem:[%s8 + $0x4] sm:$0x1]
    %v1537 = vlaneseq
    %v1538 = vshrl.u32 %v1537, 7
    %v1539 = vsub.s32 0, %v1538
    %v1540 = vrot.slane %v1536, %v1539
    %v1549 = vunpack.c.l.b16 %v1528
    %v1550 = vunpack.c.l.b16 %v1529
    %v1551 = vunpack.c.l.b16 %v1530
    %v1552 = vunpack.c.l.b16 %v1531
    %v1553 = vunpack.c.l.b16 %v1532
    %v1554 = vunpack.c.l.b16 %v1533
    %v1555 = vunpack.c.l.b16 %v1534
    %v1556 = vunpack.c.l.b16 %v1535
    %v1557 = vpack.c.b16 %v1550, %v1549
    %v1558 = vpack.c.b16 %v1552, %v1551
    %v1559 = vpack.c.b16 %v1554, %v1553
    %v1560 = vpack.c.b16 %v1556, %v1555
    %v1566 = vsel %vm463, %v1526, 0
    %1568 = vmatprep.subr.bf16.mxu0 0
    %1569 = vmatpush1.bf16.msra.mxu0 %v1557
    %1570 = vmatprep.subr.bf16.mxu0 0
    %1571 = vmatpush1.bf16.msra.mxu0 %v1558
    %1572 = vmatprep.subr.bf16.mxu0 0
    %1573 = vmatpush1.bf16.msra.mxu0 %v1559
    %1574 = vmatprep.subr.bf16.mxu0 0
    %1575 = vmatpush1.bf16.msra.mxu0 %v1560
    %1576 = vmatprep.subr.bf16.mxu0 0
    %1577 = vmatpush1.bf16.msra.mxu0 0
    %1578 = vmatprep.subr.bf16.mxu0 0
    %1579 = vmatpush1.bf16.msra.mxu0 0
    %1580 = vmatprep.subr.bf16.mxu0 0
    %1581 = vmatpush1.bf16.msra.mxu0 0
    %1582 = vmatprep.subr.bf16.mxu0 0
    %1583 = vmatpush1.bf16.msra.mxu0 0
    %1584 = vmatprep.subr.bf16.mxu0 0
    %1585 = vmatpush1.bf16.msra.mxu0 0
    %1586 = vmatprep.subr.bf16.mxu0 0
    %1587 = vmatpush1.bf16.msra.mxu0 0
    %1588 = vmatprep.subr.bf16.mxu0 0
    %1589 = vmatpush1.bf16.msra.mxu0 0
    %1590 = vmatprep.subr.bf16.mxu0 0
    %1591 = vmatpush1.bf16.msra.mxu0 0
    %1592 = vmatprep.subr.bf16.mxu0 0
    %1593 = vmatpush1.bf16.msra.mxu0 0
    %1594 = vmatprep.subr.bf16.mxu0 0
    %1595 = vmatpush1.bf16.msra.mxu0 0
    %1596 = vmatprep.subr.bf16.mxu0 0
    %1597 = vmatpush1.bf16.msra.mxu0 0
    %1598 = vmatprep.subr.bf16.mxu0 0
    %1599 = vmatpush1.bf16.msra.mxu0 0
    %1600 = vmatprep.mubr.bf16.mxu0 0
    %1601 = vmatmul.mubr.bf16.gmra.mrb[0].mxu0 %v1566
    %v1602 = vpop.f32.mrb[0].mxu0
    %v1603 = vadd.f32 %v1540, %v1602
    %v1604 = vpop.f32.mrb[0].mxu0
    %v1605 = vpop.f32.mrb[0].mxu0
    %v1606 = vpop.f32.mrb[0].mxu0
    %1607 = vdwg.mxu0
    %v1608 = vmax.f32 %v1603, 0.0
    %v1609 = vpack.c.bf16 %v1608, %v1608
    %s1610 = scalar_lea.vmem [#allocation7], 256
    %v1611 = vld [vmem:[%s1610] sm:$0xff]
    %v1612 = vld [vmem:[%s1610 + $0x8] sm:$0xff]
    %v1613 = vld [vmem:[%s1610 + $0x10] sm:$0xff]
    %v1614 = vld [vmem:[%s1610 + $0x18] sm:$0xff]
    %v1615 = vld [vmem:[%s1610 + $0x20] sm:$0xff]
    %v1616 = vld [vmem:[%s1610 + $0x28] sm:$0xff]
    %v1617 = vld [vmem:[%s1610 + $0x30] sm:$0xff]
    %v1618 = vld [vmem:[%s1610 + $0x38] sm:$0xff]
    %s1619 = scalar_lea.vmem %s10, 4
    %v1620 = vld [vmem:[%s1619] ss:$8 sm:$0x3]
    %v1622 = vlaneseq
    %v1623 = vshrl.u32 %v1622, 7
    %v1624 = vsub.s32 0, %v1623
    %v1625 = vrot.slane %v1620, %v1624
    %v1626 = vlaneseq
    %v1627 = vshrl.u32 %v1626, 7
    %v1628 = vsub.s32 1, %v1627
    %v1629 = vrot.slane %v1620, %v1628
    %v1640 = vunpack.c.l.b16 %v1611
    %v1641 = vunpack.c.h.b16 %v1611
    %v1642 = vunpack.c.l.b16 %v1612
    %v1643 = vunpack.c.h.b16 %v1612
    %v1644 = vunpack.c.l.b16 %v1613
    %v1645 = vunpack.c.h.b16 %v1613
    %v1646 = vunpack.c.l.b16 %v1614
    %v1647 = vunpack.c.h.b16 %v1614
    %v1648 = vunpack.c.l.b16 %v1615
    %v1649 = vunpack.c.h.b16 %v1615
    %v1650 = vunpack.c.l.b16 %v1616
    %v1651 = vunpack.c.h.b16 %v1616
    %v1652 = vunpack.c.l.b16 %v1617
    %v1653 = vunpack.c.h.b16 %v1617
    %v1654 = vunpack.c.l.b16 %v1618
    %v1655 = vunpack.c.h.b16 %v1618
    %v1656 = vpack.c.b16 %v1642, %v1640
    %v1657 = vpack.c.b16 %v1643, %v1641
    %v1658 = vpack.c.b16 %v1646, %v1644
    %v1659 = vpack.c.b16 %v1647, %v1645
    %v1660 = vpack.c.b16 %v1650, %v1648
    %v1661 = vpack.c.b16 %v1651, %v1649
    %v1662 = vpack.c.b16 %v1654, %v1652
    %v1663 = vpack.c.b16 %v1655, %v1653
    %v1673 = vsel %vm463, %v1609, 0
    %1675 = vmatprep.subr.bf16.mxu0 %v1657
    %1676 = vmatpush1.bf16.msra.mxu0 %v1656
    %1677 = vmatprep.subr.bf16.mxu0 %v1659
    %1678 = vmatpush1.bf16.msra.mxu0 %v1658
    %1679 = vmatprep.subr.bf16.mxu0 %v1661
    %1680 = vmatpush1.bf16.msra.mxu0 %v1660
    %1681 = vmatprep.subr.bf16.mxu0 %v1663
    %1682 = vmatpush1.bf16.msra.mxu0 %v1662
    %1683 = vmatprep.subr.bf16.mxu0 0
    %1684 = vmatpush1.bf16.msra.mxu0 0
    %1685 = vmatprep.subr.bf16.mxu0 0
    %1686 = vmatpush1.bf16.msra.mxu0 0
    %1687 = vmatprep.subr.bf16.mxu0 0
    %1688 = vmatpush1.bf16.msra.mxu0 0
    %1689 = vmatprep.subr.bf16.mxu0 0
    %1690 = vmatpush1.bf16.msra.mxu0 0
    %1691 = vmatprep.subr.bf16.mxu0 0
    %1692 = vmatpush1.bf16.msra.mxu0 0
    %1693 = vmatprep.subr.bf16.mxu0 0
    %1694 = vmatpush1.bf16.msra.mxu0 0
    %1695 = vmatprep.subr.bf16.mxu0 0
    %1696 = vmatpush1.bf16.msra.mxu0 0
    %1697 = vmatprep.subr.bf16.mxu0 0
    %1698 = vmatpush1.bf16.msra.mxu0 0
    %1699 = vmatprep.subr.bf16.mxu0 0
    %1700 = vmatpush1.bf16.msra.mxu0 0
    %1701 = vmatprep.subr.bf16.mxu0 0
    %1702 = vmatpush1.bf16.msra.mxu0 0
    %1703 = vmatprep.subr.bf16.mxu0 0
    %1704 = vmatpush1.bf16.msra.mxu0 0
    %1705 = vmatprep.subr.bf16.mxu0 0
    %1706 = vmatpush1.bf16.msra.mxu0 0
    %1707 = vmatprep.mubr.bf16.mxu0 0
    %1708 = vmatmul.mubr.bf16.gmra.mrb[0].mxu0 %v1673
    %v1709 = vpop.f32.mrb[0].mxu0
    %v1710 = vadd.f32 %v1625, %v1709
    %v1711 = vpop.f32.mrb[0].mxu0
    %v1712 = vadd.f32 %v1629, %v1711
    %v1713 = vpop.f32.mrb[0].mxu0
    %v1714 = vpop.f32.mrb[0].mxu0
    %1715 = vdwg.mxu0
    %v1718 = vcombine.low %v1710, %v1712
    %v1719 = vcombine.high %v1710, %v1712
    %v1721 = vunpack.c.l.s4 1966171168
    %v1722 = vunpack.c.0.s8 %v1721
    %v1723 = vlaneseq
    %v1724 = vshrl.u32 %v1723, 7
    %v1725 = vsub.s32 %v1722, %v1724
    %v1726 = vrot.slane %v1718, %v1725
    %v1728 = vunpack.c.l.s4 1966171168
    %v1729 = vunpack.c.0.s8 %v1728
    %v1730 = vlaneseq
    %v1731 = vshrl.u32 %v1730, 7
    %v1732 = vsub.s32 %v1729, %v1731
    %v1733 = vrot.slane %v1719, %v1732
    %v1734 = vcombine.high %v1726, %v1726
    %v1735 = vcombine.high %v1733, %v1733
    %v1737 = vunpack.c.l.s4 1966171168
    %v1738 = vunpack.c.0.s8 %v1737
    %v1739 = vlaneseq
    %v1740 = vshrl.u32 %v1739, 7
    %v1741 = vsub.s32 %v1738, %v1740
    %v1742 = vrot.slane %v1726, %v1741
    %v1744 = vunpack.c.l.s4 1966171168
    %v1745 = vunpack.c.0.s8 %v1744
    %v1746 = vlaneseq
    %v1747 = vshrl.u32 %v1746, 7
    %v1748 = vsub.s32 %v1745, %v1747
    %v1749 = vrot.slane %v1733, %v1748
    %v1751 = vunpack.c.l.s4 1966171168
    %v1752 = vunpack.c.0.s8 %v1751
    %v1753 = vlaneseq
    %v1754 = vshrl.u32 %v1753, 7
    %v1755 = vsub.s32 %v1752, %v1754
    %v1756 = vrot.slane %v1734, %v1755
    %v1758 = vunpack.c.l.s4 1966171168
    %v1759 = vunpack.c.0.s8 %v1758
    %v1760 = vlaneseq
    %v1761 = vshrl.u32 %v1760, 7
    %v1762 = vsub.s32 %v1759, %v1761
    %v1763 = vrot.slane %v1735, %v1762
    %v1764 = vcombine.high %v1742, %v1742
    %v1765 = vcombine.high %v1749, %v1749
    %v1766 = vcombine.high %v1756, %v1756
    %v1767 = vcombine.high %v1763, %v1763
    %s1776 = scalar_lea.vmem %s11, 4
    %1777 = vst.msk [vmem:[%s1776] ss:$8 sm:$0x3] %vm676, %v1742
    %1778 = vst.msk [vmem:[%s1776] ss:$8 sm:$0x0] %vm676, %v1742
    %s1779 = scalar_lea.vmem %s11, 20
    %1780 = vst.msk [vmem:[%s1779] ss:$8 sm:$0x3] %vm676, %v1756
    %1781 = vst.msk [vmem:[%s1779] ss:$8 sm:$0x0] %vm676, %v1756
    %s1782 = scalar_lea.vmem %s11, 36
    %1783 = vst.msk [vmem:[%s1782] ss:$8 sm:$0x3] %vm676, %v1764
    %1784 = vst.msk [vmem:[%s1782] ss:$8 sm:$0x0] %vm676, %v1764
    %s1785 = scalar_lea.vmem %s11, 52
    %1786 = vst.msk [vmem:[%s1785] ss:$8 sm:$0x3] %vm676, %v1766
    %1787 = vst.msk [vmem:[%s1785] ss:$8 sm:$0x0] %vm676, %v1766
    %s1788 = scalar_lea.vmem %s11, 68
    %1789 = vst.msk [vmem:[%s1788] ss:$8 sm:$0x3] %vm676, %v1749
    %1790 = vst.msk [vmem:[%s1788] ss:$8 sm:$0x0] %vm676, %v1749
    %s1791 = scalar_lea.vmem %s11, 84
    %1792 = vst.msk [vmem:[%s1791] ss:$8 sm:$0x3] %vm676, %v1763
    %1793 = vst.msk [vmem:[%s1791] ss:$8 sm:$0x0] %vm676, %v1763
    %s1794 = scalar_lea.vmem %s11, 100
    %1795 = vst.msk [vmem:[%s1794] ss:$8 sm:$0x3] %vm676, %v1765
    %1796 = vst.msk [vmem:[%s1794] ss:$8 sm:$0x0] %vm676, %v1765
    %s1797 = scalar_lea.vmem %s11, 116
    %1798 = vst.msk [vmem:[%s1797] ss:$8 sm:$0x3] %vm676, %v1767
    %1799 = vst.msk [vmem:[%s1797] ss:$8 sm:$0x0] %vm676, %v1767
    %s1800 = scalar_lea.vmem [#allocation6], 160
    %v1801 = vld [vmem:[%s1800] sm:$0xf]
    %v1802 = vld [vmem:[%s1800 + $0x4] sm:$0xf]
    %v1803 = vld [vmem:[%s1800 + $0x8] sm:$0xf]
    %v1804 = vld [vmem:[%s1800 + $0xc] sm:$0xf]
    %v1805 = vld [vmem:[%s1800 + $0x10] sm:$0xf]
    %v1806 = vld [vmem:[%s1800 + $0x14] sm:$0xf]
    %v1807 = vld [vmem:[%s1800 + $0x18] sm:$0xf]
    %v1808 = vld [vmem:[%s1800 + $0x1c] sm:$0xf]
    %v1809 = vld [vmem:[%s8 + $0x5] sm:$0x1]
    %v1810 = vlaneseq
    %v1811 = vshrl.u32 %v1810, 7
    %v1812 = vsub.s32 0, %v1811
    %v1813 = vrot.slane %v1809, %v1812
    %1815 = vrot.lane.b32.xlu0 %v1526, 64
    %v1816 = vpop.permute.xlu0 %1815
    %v1825 = vunpack.c.l.b16 %v1801
    %v1826 = vunpack.c.l.b16 %v1802
    %v1827 = vunpack.c.l.b16 %v1803
    %v1828 = vunpack.c.l.b16 %v1804
    %v1829 = vunpack.c.l.b16 %v1805
    %v1830 = vunpack.c.l.b16 %v1806
    %v1831 = vunpack.c.l.b16 %v1807
    %v1832 = vunpack.c.l.b16 %v1808
    %v1833 = vpack.c.b16 %v1826, %v1825
    %v1834 = vpack.c.b16 %v1828, %v1827
    %v1835 = vpack.c.b16 %v1830, %v1829
    %v1836 = vpack.c.b16 %v1832, %v1831
    %v1842 = vsel %vm463, %v1816, 0
    %1844 = vmatprep.subr.bf16.mxu0 0
    %1845 = vmatpush1.bf16.msra.mxu0 %v1833
    %1846 = vmatprep.subr.bf16.mxu0 0
    %1847 = vmatpush1.bf16.msra.mxu0 %v1834
    %1848 = vmatprep.subr.bf16.mxu0 0
    %1849 = vmatpush1.bf16.msra.mxu0 %v1835
    %1850 = vmatprep.subr.bf16.mxu0 0
    %1851 = vmatpush1.bf16.msra.mxu0 %v1836
    %1852 = vmatprep.subr.bf16.mxu0 0
    %1853 = vmatpush1.bf16.msra.mxu0 0
    %1854 = vmatprep.subr.bf16.mxu0 0
    %1855 = vmatpush1.bf16.msra.mxu0 0
    %1856 = vmatprep.subr.bf16.mxu0 0
    %1857 = vmatpush1.bf16.msra.mxu0 0
    %1858 = vmatprep.subr.bf16.mxu0 0
    %1859 = vmatpush1.bf16.msra.mxu0 0
    %1860 = vmatprep.subr.bf16.mxu0 0
    %1861 = vmatpush1.bf16.msra.mxu0 0
    %1862 = vmatprep.subr.bf16.mxu0 0
    %1863 = vmatpush1.bf16.msra.mxu0 0
    %1864 = vmatprep.subr.bf16.mxu0 0
    %1865 = vmatpush1.bf16.msra.mxu0 0
    %1866 = vmatprep.subr.bf16.mxu0 0
    %1867 = vmatpush1.bf16.msra.mxu0 0
    %1868 = vmatprep.subr.bf16.mxu0 0
    %1869 = vmatpush1.bf16.msra.mxu0 0
    %1870 = vmatprep.subr.bf16.mxu0 0
    %1871 = vmatpush1.bf16.msra.mxu0 0
    %1872 = vmatprep.subr.bf16.mxu0 0
    %1873 = vmatpush1.bf16.msra.mxu0 0
    %1874 = vmatprep.subr.bf16.mxu0 0
    %1875 = vmatpush1.bf16.msra.mxu0 0
    %1876 = vmatprep.mubr.bf16.mxu0 0
    %1877 = vmatmul.mubr.bf16.gmra.mrb[0].mxu0 %v1842
    %v1878 = vpop.f32.mrb[0].mxu0
    %v1879 = vadd.f32 %v1813, %v1878
    %v1880 = vpop.f32.mrb[0].mxu0
    %v1881 = vpop.f32.mrb[0].mxu0
    %v1882 = vpop.f32.mrb[0].mxu0
    %1883 = vdwg.mxu0
    %v1884 = vmax.f32 %v1879, 0.0
    %v1885 = vpack.c.bf16 %v1884, %v1884
    %s1886 = scalar_lea.vmem [#allocation7], 320
    %v1887 = vld [vmem:[%s1886] sm:$0xff]
    %v1888 = vld [vmem:[%s1886 + $0x8] sm:$0xff]
    %v1889 = vld [vmem:[%s1886 + $0x10] sm:$0xff]
    %v1890 = vld [vmem:[%s1886 + $0x18] sm:$0xff]
    %v1891 = vld [vmem:[%s1886 + $0x20] sm:$0xff]
    %v1892 = vld [vmem:[%s1886 + $0x28] sm:$0xff]
    %v1893 = vld [vmem:[%s1886 + $0x30] sm:$0xff]
    %v1894 = vld [vmem:[%s1886 + $0x38] sm:$0xff]
    %s1895 = scalar_lea.vmem %s10, 5
    %v1896 = vld [vmem:[%s1895] ss:$8 sm:$0x3]
    %v1898 = vlaneseq
    %v1899 = vshrl.u32 %v1898, 7
    %v1900 = vsub.s32 0, %v1899
    %v1901 = vrot.slane %v1896, %v1900
    %v1902 = vlaneseq
    %v1903 = vshrl.u32 %v1902, 7
    %v1904 = vsub.s32 1, %v1903
    %v1905 = vrot.slane %v1896, %v1904
    %v1916 = vunpack.c.l.b16 %v1887
    %v1917 = vunpack.c.h.b16 %v1887
    %v1918 = vunpack.c.l.b16 %v1888
    %v1919 = vunpack.c.h.b16 %v1888
    %v1920 = vunpack.c.l.b16 %v1889
    %v1921 = vunpack.c.h.b16 %v1889
    %v1922 = vunpack.c.l.b16 %v1890
    %v1923 = vunpack.c.h.b16 %v1890
    %v1924 = vunpack.c.l.b16 %v1891
    %v1925 = vunpack.c.h.b16 %v1891
    %v1926 = vunpack.c.l.b16 %v1892
    %v1927 = vunpack.c.h.b16 %v1892
    %v1928 = vunpack.c.l.b16 %v1893
    %v1929 = vunpack.c.h.b16 %v1893
    %v1930 = vunpack.c.l.b16 %v1894
    %v1931 = vunpack.c.h.b16 %v1894
    %v1932 = vpack.c.b16 %v1918, %v1916
    %v1933 = vpack.c.b16 %v1919, %v1917
    %v1934 = vpack.c.b16 %v1922, %v1920
    %v1935 = vpack.c.b16 %v1923, %v1921
    %v1936 = vpack.c.b16 %v1926, %v1924
    %v1937 = vpack.c.b16 %v1927, %v1925
    %v1938 = vpack.c.b16 %v1930, %v1928
    %v1939 = vpack.c.b16 %v1931, %v1929
    %v1949 = vsel %vm463, %v1885, 0
    %1951 = vmatprep.subr.bf16.mxu0 %v1933
    %1952 = vmatpush1.bf16.msra.mxu0 %v1932
    %1953 = vmatprep.subr.bf16.mxu0 %v1935
    %1954 = vmatpush1.bf16.msra.mxu0 %v1934
    %1955 = vmatprep.subr.bf16.mxu0 %v1937
    %1956 = vmatpush1.bf16.msra.mxu0 %v1936
    %1957 = vmatprep.subr.bf16.mxu0 %v1939
    %1958 = vmatpush1.bf16.msra.mxu0 %v1938
    %1959 = vmatprep.subr.bf16.mxu0 0
    %1960 = vmatpush1.bf16.msra.mxu0 0
    %1961 = vmatprep.subr.bf16.mxu0 0
    %1962 = vmatpush1.bf16.msra.mxu0 0
    %1963 = vmatprep.subr.bf16.mxu0 0
    %1964 = vmatpush1.bf16.msra.mxu0 0
    %1965 = vmatprep.subr.bf16.mxu0 0
    %1966 = vmatpush1.bf16.msra.mxu0 0
    %1967 = vmatprep.subr.bf16.mxu0 0
    %1968 = vmatpush1.bf16.msra.mxu0 0
    %1969 = vmatprep.subr.bf16.mxu0 0
    %1970 = vmatpush1.bf16.msra.mxu0 0
    %1971 = vmatprep.subr.bf16.mxu0 0
    %1972 = vmatpush1.bf16.msra.mxu0 0
    %1973 = vmatprep.subr.bf16.mxu0 0
    %1974 = vmatpush1.bf16.msra.mxu0 0
    %1975 = vmatprep.subr.bf16.mxu0 0
    %1976 = vmatpush1.bf16.msra.mxu0 0
    %1977 = vmatprep.subr.bf16.mxu0 0
    %1978 = vmatpush1.bf16.msra.mxu0 0
    %1979 = vmatprep.subr.bf16.mxu0 0
    %1980 = vmatpush1.bf16.msra.mxu0 0
    %1981 = vmatprep.subr.bf16.mxu0 0
    %1982 = vmatpush1.bf16.msra.mxu0 0
    %1983 = vmatprep.mubr.bf16.mxu0 0
    %1984 = vmatmul.mubr.bf16.gmra.mrb[0].mxu0 %v1949
    %v1985 = vpop.f32.mrb[0].mxu0
    %v1986 = vadd.f32 %v1901, %v1985
    %v1987 = vpop.f32.mrb[0].mxu0
    %v1988 = vadd.f32 %v1905, %v1987
    %v1989 = vpop.f32.mrb[0].mxu0
    %v1990 = vpop.f32.mrb[0].mxu0
    %1991 = vdwg.mxu0
    %v1994 = vcombine.low %v1986, %v1988
    %v1995 = vcombine.high %v1986, %v1988
    %v1997 = vunpack.c.l.s4 1966171168
    %v1998 = vunpack.c.0.s8 %v1997
    %v1999 = vlaneseq
    %v2000 = vshrl.u32 %v1999, 7
    %v2001 = vsub.s32 %v1998, %v2000
    %v2002 = vrot.slane %v1994, %v2001
    %v2004 = vunpack.c.l.s4 1966171168
    %v2005 = vunpack.c.0.s8 %v2004
    %v2006 = vlaneseq
    %v2007 = vshrl.u32 %v2006, 7
    %v2008 = vsub.s32 %v2005, %v2007
    %v2009 = vrot.slane %v1995, %v2008
    %v2010 = vcombine.high %v2002, %v2002
    %v2011 = vcombine.high %v2009, %v2009
    %v2013 = vunpack.c.l.s4 1966171168
    %v2014 = vunpack.c.0.s8 %v2013
    %v2015 = vlaneseq
    %v2016 = vshrl.u32 %v2015, 7
    %v2017 = vsub.s32 %v2014, %v2016
    %v2018 = vrot.slane %v2002, %v2017
    %v2020 = vunpack.c.l.s4 1966171168
    %v2021 = vunpack.c.0.s8 %v2020
    %v2022 = vlaneseq
    %v2023 = vshrl.u32 %v2022, 7
    %v2024 = vsub.s32 %v2021, %v2023
    %v2025 = vrot.slane %v2009, %v2024
    %v2027 = vunpack.c.l.s4 1966171168
    %v2028 = vunpack.c.0.s8 %v2027
    %v2029 = vlaneseq
    %v2030 = vshrl.u32 %v2029, 7
    %v2031 = vsub.s32 %v2028, %v2030
    %v2032 = vrot.slane %v2010, %v2031
    %v2034 = vunpack.c.l.s4 1966171168
    %v2035 = vunpack.c.0.s8 %v2034
    %v2036 = vlaneseq
    %v2037 = vshrl.u32 %v2036, 7
    %v2038 = vsub.s32 %v2035, %v2037
    %v2039 = vrot.slane %v2011, %v2038
    %v2040 = vcombine.high %v2018, %v2018
    %v2041 = vcombine.high %v2025, %v2025
    %v2042 = vcombine.high %v2032, %v2032
    %v2043 = vcombine.high %v2039, %v2039
    %s2052 = scalar_lea.vmem %s11, 5
    %2053 = vst.msk [vmem:[%s2052] ss:$8 sm:$0x3] %vm676, %v2018
    %2054 = vst.msk [vmem:[%s2052] ss:$8 sm:$0x0] %vm676, %v2018
    %s2055 = scalar_lea.vmem %s11, 21
    %2056 = vst.msk [vmem:[%s2055] ss:$8 sm:$0x3] %vm676, %v2032
    %2057 = vst.msk [vmem:[%s2055] ss:$8 sm:$0x0] %vm676, %v2032
    %s2058 = scalar_lea.vmem %s11, 37
    %2059 = vst.msk [vmem:[%s2058] ss:$8 sm:$0x3] %vm676, %v2040
    %2060 = vst.msk [vmem:[%s2058] ss:$8 sm:$0x0] %vm676, %v2040
    %s2061 = scalar_lea.vmem %s11, 53
    %2062 = vst.msk [vmem:[%s2061] ss:$8 sm:$0x3] %vm676, %v2042
    %2063 = vst.msk [vmem:[%s2061] ss:$8 sm:$0x0] %vm676, %v2042
    %s2064 = scalar_lea.vmem %s11, 69
    %2065 = vst.msk [vmem:[%s2064] ss:$8 sm:$0x3] %vm676, %v2025
    %2066 = vst.msk [vmem:[%s2064] ss:$8 sm:$0x0] %vm676, %v2025
    %s2067 = scalar_lea.vmem %s11, 85
    %2068 = vst.msk [vmem:[%s2067] ss:$8 sm:$0x3] %vm676, %v2039
    %2069 = vst.msk [vmem:[%s2067] ss:$8 sm:$0x0] %vm676, %v2039
    %s2070 = scalar_lea.vmem %s11, 101
    %2071 = vst.msk [vmem:[%s2070] ss:$8 sm:$0x3] %vm676, %v2041
    %2072 = vst.msk [vmem:[%s2070] ss:$8 sm:$0x0] %vm676, %v2041
    %s2073 = scalar_lea.vmem %s11, 117
    %2074 = vst.msk [vmem:[%s2073] ss:$8 sm:$0x3] %vm676, %v2043
    %2075 = vst.msk [vmem:[%s2073] ss:$8 sm:$0x0] %vm676, %v2043
    %v2076 = vpack.c.bf16 %v424, %v424
    %s2077 = scalar_lea.vmem [#allocation6], 192
    %v2078 = vld [vmem:[%s2077] sm:$0xf]
    %v2079 = vld [vmem:[%s2077 + $0x4] sm:$0xf]
    %v2080 = vld [vmem:[%s2077 + $0x8] sm:$0xf]
    %v2081 = vld [vmem:[%s2077 + $0xc] sm:$0xf]
    %v2082 = vld [vmem:[%s2077 + $0x10] sm:$0xf]
    %v2083 = vld [vmem:[%s2077 + $0x14] sm:$0xf]
    %v2084 = vld [vmem:[%s2077 + $0x18] sm:$0xf]
    %v2085 = vld [vmem:[%s2077 + $0x1c] sm:$0xf]
    %v2086 = vld [vmem:[%s8 + $0x6] sm:$0x1]
    %v2087 = vlaneseq
    %v2088 = vshrl.u32 %v2087, 7
    %v2089 = vsub.s32 0, %v2088
    %v2090 = vrot.slane %v2086, %v2089
    %v2099 = vunpack.c.l.b16 %v2078
    %v2100 = vunpack.c.l.b16 %v2079
    %v2101 = vunpack.c.l.b16 %v2080
    %v2102 = vunpack.c.l.b16 %v2081
    %v2103 = vunpack.c.l.b16 %v2082
    %v2104 = vunpack.c.l.b16 %v2083
    %v2105 = vunpack.c.l.b16 %v2084
    %v2106 = vunpack.c.l.b16 %v2085
    %v2107 = vpack.c.b16 %v2100, %v2099
    %v2108 = vpack.c.b16 %v2102, %v2101
    %v2109 = vpack.c.b16 %v2104, %v2103
    %v2110 = vpack.c.b16 %v2106, %v2105
    %v2116 = vsel %vm463, %v2076, 0
    %2118 = vmatprep.subr.bf16.mxu0 0
    %2119 = vmatpush1.bf16.msra.mxu0 %v2107
    %2120 = vmatprep.subr.bf16.mxu0 0
    %2121 = vmatpush1.bf16.msra.mxu0 %v2108
    %2122 = vmatprep.subr.bf16.mxu0 0
    %2123 = vmatpush1.bf16.msra.mxu0 %v2109
    %2124 = vmatprep.subr.bf16.mxu0 0
    %2125 = vmatpush1.bf16.msra.mxu0 %v2110
    %2126 = vmatprep.subr.bf16.mxu0 0
    %2127 = vmatpush1.bf16.msra.mxu0 0
    %2128 = vmatprep.subr.bf16.mxu0 0
    %2129 = vmatpush1.bf16.msra.mxu0 0
    %2130 = vmatprep.subr.bf16.mxu0 0
    %2131 = vmatpush1.bf16.msra.mxu0 0
    %2132 = vmatprep.subr.bf16.mxu0 0
    %2133 = vmatpush1.bf16.msra.mxu0 0
    %2134 = vmatprep.subr.bf16.mxu0 0
    %2135 = vmatpush1.bf16.msra.mxu0 0
    %2136 = vmatprep.subr.bf16.mxu0 0
    %2137 = vmatpush1.bf16.msra.mxu0 0
    %2138 = vmatprep.subr.bf16.mxu0 0
    %2139 = vmatpush1.bf16.msra.mxu0 0
    %2140 = vmatprep.subr.bf16.mxu0 0
    %2141 = vmatpush1.bf16.msra.mxu0 0
    %2142 = vmatprep.subr.bf16.mxu0 0
    %2143 = vmatpush1.bf16.msra.mxu0 0
    %2144 = vmatprep.subr.bf16.mxu0 0
    %2145 = vmatpush1.bf16.msra.mxu0 0
    %2146 = vmatprep.subr.bf16.mxu0 0
    %2147 = vmatpush1.bf16.msra.mxu0 0
    %2148 = vmatprep.subr.bf16.mxu0 0
    %2149 = vmatpush1.bf16.msra.mxu0 0
    %2150 = vmatprep.mubr.bf16.mxu0 0
    %2151 = vmatmul.mubr.bf16.gmra.mrb[0].mxu0 %v2116
    %v2152 = vpop.f32.mrb[0].mxu0
    %v2153 = vadd.f32 %v2090, %v2152
    %v2154 = vpop.f32.mrb[0].mxu0
    %v2155 = vpop.f32.mrb[0].mxu0
    %v2156 = vpop.f32.mrb[0].mxu0
    %2157 = vdwg.mxu0
    %v2158 = vmax.f32 %v2153, 0.0
    %v2159 = vpack.c.bf16 %v2158, %v2158
    %s2160 = scalar_lea.vmem [#allocation7], 384
    %v2161 = vld [vmem:[%s2160] sm:$0xff]
    %v2162 = vld [vmem:[%s2160 + $0x8] sm:$0xff]
    %v2163 = vld [vmem:[%s2160 + $0x10] sm:$0xff]
    %v2164 = vld [vmem:[%s2160 + $0x18] sm:$0xff]
    %v2165 = vld [vmem:[%s2160 + $0x20] sm:$0xff]
    %v2166 = vld [vmem:[%s2160 + $0x28] sm:$0xff]
    %v2167 = vld [vmem:[%s2160 + $0x30] sm:$0xff]
    %v2168 = vld [vmem:[%s2160 + $0x38] sm:$0xff]
    %s2169 = scalar_lea.vmem %s10, 6
    %v2170 = vld [vmem:[%s2169] ss:$8 sm:$0x3]
    %v2172 = vlaneseq
    %v2173 = vshrl.u32 %v2172, 7
    %v2174 = vsub.s32 0, %v2173
    %v2175 = vrot.slane %v2170, %v2174
    %v2176 = vlaneseq
    %v2177 = vshrl.u32 %v2176, 7
    %v2178 = vsub.s32 1, %v2177
    %v2179 = vrot.slane %v2170, %v2178
    %v2190 = vunpack.c.l.b16 %v2161
    %v2191 = vunpack.c.h.b16 %v2161
    %v2192 = vunpack.c.l.b16 %v2162
    %v2193 = vunpack.c.h.b16 %v2162
    %v2194 = vunpack.c.l.b16 %v2163
    %v2195 = vunpack.c.h.b16 %v2163
    %v2196 = vunpack.c.l.b16 %v2164
    %v2197 = vunpack.c.h.b16 %v2164
    %v2198 = vunpack.c.l.b16 %v2165
    %v2199 = vunpack.c.h.b16 %v2165
    %v2200 = vunpack.c.l.b16 %v2166
    %v2201 = vunpack.c.h.b16 %v2166
    %v2202 = vunpack.c.l.b16 %v2167
    %v2203 = vunpack.c.h.b16 %v2167
    %v2204 = vunpack.c.l.b16 %v2168
    %v2205 = vunpack.c.h.b16 %v2168
    %v2206 = vpack.c.b16 %v2192, %v2190
    %v2207 = vpack.c.b16 %v2193, %v2191
    %v2208 = vpack.c.b16 %v2196, %v2194
    %v2209 = vpack.c.b16 %v2197, %v2195
    %v2210 = vpack.c.b16 %v2200, %v2198
    %v2211 = vpack.c.b16 %v2201, %v2199
    %v2212 = vpack.c.b16 %v2204, %v2202
    %v2213 = vpack.c.b16 %v2205, %v2203
    %v2223 = vsel %vm463, %v2159, 0
    %2225 = vmatprep.subr.bf16.mxu0 %v2207
    %2226 = vmatpush1.bf16.msra.mxu0 %v2206
    %2227 = vmatprep.subr.bf16.mxu0 %v2209
    %2228 = vmatpush1.bf16.msra.mxu0 %v2208
    %2229 = vmatprep.subr.bf16.mxu0 %v2211
    %2230 = vmatpush1.bf16.msra.mxu0 %v2210
    %2231 = vmatprep.subr.bf16.mxu0 %v2213
    %2232 = vmatpush1.bf16.msra.mxu0 %v2212
    %2233 = vmatprep.subr.bf16.mxu0 0
    %2234 = vmatpush1.bf16.msra.mxu0 0
    %2235 = vmatprep.subr.bf16.mxu0 0
    %2236 = vmatpush1.bf16.msra.mxu0 0
    %2237 = vmatprep.subr.bf16.mxu0 0
    %2238 = vmatpush1.bf16.msra.mxu0 0
    %2239 = vmatprep.subr.bf16.mxu0 0
    %2240 = vmatpush1.bf16.msra.mxu0 0
    %2241 = vmatprep.subr.bf16.mxu0 0
    %2242 = vmatpush1.bf16.msra.mxu0 0
    %2243 = vmatprep.subr.bf16.mxu0 0
    %2244 = vmatpush1.bf16.msra.mxu0 0
    %2245 = vmatprep.subr.bf16.mxu0 0
    %2246 = vmatpush1.bf16.msra.mxu0 0
    %2247 = vmatprep.subr.bf16.mxu0 0
    %2248 = vmatpush1.bf16.msra.mxu0 0
    %2249 = vmatprep.subr.bf16.mxu0 0
    %2250 = vmatpush1.bf16.msra.mxu0 0
    %2251 = vmatprep.subr.bf16.mxu0 0
    %2252 = vmatpush1.bf16.msra.mxu0 0
    %2253 = vmatprep.subr.bf16.mxu0 0
    %2254 = vmatpush1.bf16.msra.mxu0 0
    %2255 = vmatprep.subr.bf16.mxu0 0
    %2256 = vmatpush1.bf16.msra.mxu0 0
    %2257 = vmatprep.mubr.bf16.mxu0 0
    %2258 = vmatmul.mubr.bf16.gmra.mrb[0].mxu0 %v2223
    %v2259 = vpop.f32.mrb[0].mxu0
    %v2260 = vadd.f32 %v2175, %v2259
    %v2261 = vpop.f32.mrb[0].mxu0
    %v2262 = vadd.f32 %v2179, %v2261
    %v2263 = vpop.f32.mrb[0].mxu0
    %v2264 = vpop.f32.mrb[0].mxu0
    %2265 = vdwg.mxu0
    %v2268 = vcombine.low %v2260, %v2262
    %v2269 = vcombine.high %v2260, %v2262
    %v2271 = vunpack.c.l.s4 1966171168
    %v2272 = vunpack.c.0.s8 %v2271
    %v2273 = vlaneseq
    %v2274 = vshrl.u32 %v2273, 7
    %v2275 = vsub.s32 %v2272, %v2274
    %v2276 = vrot.slane %v2268, %v2275
    %v2278 = vunpack.c.l.s4 1966171168
    %v2279 = vunpack.c.0.s8 %v2278
    %v2280 = vlaneseq
    %v2281 = vshrl.u32 %v2280, 7
    %v2282 = vsub.s32 %v2279, %v2281
    %v2283 = vrot.slane %v2269, %v2282
    %v2284 = vcombine.high %v2276, %v2276
    %v2285 = vcombine.high %v2283, %v2283
    %v2287 = vunpack.c.l.s4 1966171168
    %v2288 = vunpack.c.0.s8 %v2287
    %v2289 = vlaneseq
    %v2290 = vshrl.u32 %v2289, 7
    %v2291 = vsub.s32 %v2288, %v2290
    %v2292 = vrot.slane %v2276, %v2291
    %v2294 = vunpack.c.l.s4 1966171168
    %v2295 = vunpack.c.0.s8 %v2294
    %v2296 = vlaneseq
    %v2297 = vshrl.u32 %v2296, 7
    %v2298 = vsub.s32 %v2295, %v2297
    %v2299 = vrot.slane %v2283, %v2298
    %v2301 = vunpack.c.l.s4 1966171168
    %v2302 = vunpack.c.0.s8 %v2301
    %v2303 = vlaneseq
    %v2304 = vshrl.u32 %v2303, 7
    %v2305 = vsub.s32 %v2302, %v2304
    %v2306 = vrot.slane %v2284, %v2305
    %v2308 = vunpack.c.l.s4 1966171168
    %v2309 = vunpack.c.0.s8 %v2308
    %v2310 = vlaneseq
    %v2311 = vshrl.u32 %v2310, 7
    %v2312 = vsub.s32 %v2309, %v2311
    %v2313 = vrot.slane %v2285, %v2312
    %v2314 = vcombine.high %v2292, %v2292
    %v2315 = vcombine.high %v2299, %v2299
    %v2316 = vcombine.high %v2306, %v2306
    %v2317 = vcombine.high %v2313, %v2313
    %s2326 = scalar_lea.vmem %s11, 6
    %2327 = vst.msk [vmem:[%s2326] ss:$8 sm:$0x3] %vm676, %v2292
    %2328 = vst.msk [vmem:[%s2326] ss:$8 sm:$0x0] %vm676, %v2292
    %s2329 = scalar_lea.vmem %s11, 22
    %2330 = vst.msk [vmem:[%s2329] ss:$8 sm:$0x3] %vm676, %v2306
    %2331 = vst.msk [vmem:[%s2329] ss:$8 sm:$0x0] %vm676, %v2306
    %s2332 = scalar_lea.vmem %s11, 38
    %2333 = vst.msk [vmem:[%s2332] ss:$8 sm:$0x3] %vm676, %v2314
    %2334 = vst.msk [vmem:[%s2332] ss:$8 sm:$0x0] %vm676, %v2314
    %s2335 = scalar_lea.vmem %s11, 54
    %2336 = vst.msk [vmem:[%s2335] ss:$8 sm:$0x3] %vm676, %v2316
    %2337 = vst.msk [vmem:[%s2335] ss:$8 sm:$0x0] %vm676, %v2316
    %s2338 = scalar_lea.vmem %s11, 70
    %2339 = vst.msk [vmem:[%s2338] ss:$8 sm:$0x3] %vm676, %v2299
    %2340 = vst.msk [vmem:[%s2338] ss:$8 sm:$0x0] %vm676, %v2299
    %s2341 = scalar_lea.vmem %s11, 86
    %2342 = vst.msk [vmem:[%s2341] ss:$8 sm:$0x3] %vm676, %v2313
    %2343 = vst.msk [vmem:[%s2341] ss:$8 sm:$0x0] %vm676, %v2313
    %s2344 = scalar_lea.vmem %s11, 102
    %2345 = vst.msk [vmem:[%s2344] ss:$8 sm:$0x3] %vm676, %v2315
    %2346 = vst.msk [vmem:[%s2344] ss:$8 sm:$0x0] %vm676, %v2315
    %s2347 = scalar_lea.vmem %s11, 118
    %2348 = vst.msk [vmem:[%s2347] ss:$8 sm:$0x3] %vm676, %v2317
    %2349 = vst.msk [vmem:[%s2347] ss:$8 sm:$0x0] %vm676, %v2317
    // Predicated region
    $region62: #{tpu_custom_call.1} parent=1 // pred_check
      _
    $region63: #{tpu_custom_call.1} parent=1 // pred_check_branch
      %2351 = sbr.rel (0) target = $region65
    $region64: #{tpu_custom_call.1} parent=1 // pred_region
      _
    $region65: #{tpu_custom_call.1} parent=1 // pred_fallthru
      _
    // Predicated region
    $region66: #{tpu_custom_call.1} parent=1 // pred_check
      _
    $region67: #{tpu_custom_call.1} parent=1 // pred_check_branch
      %2353 = sbr.rel (0) target = $region69
    $region68: #{tpu_custom_call.1} parent=1 // pred_region
      _
    $region69: #{tpu_custom_call.1} parent=1 // pred_fallthru
      _
    %2354 = vsyncpa [#allocation3], 1
    %2355 = vsyncpa [#allocation5], 1
    %2356 = vsyncpa [#allocation8], 1

</llo_original>
